<compile_context>
chip_gen: v7x
topology: tpu7x:2x2x1
jax: 0.10.0
libtpu: 0.0.40
codegen_flags: <defaults>
</compile_context>

<pallas_src>
import jax
import jax.numpy as jnp
from jax import lax
from jax.experimental import pallas as pl
from jax.experimental.pallas import tpu as pltpu

NEG_INF = -1e30


# --------------------------- fused Pallas kernel -----------------------------

def _destructor_kernel(
    # inputs
    onehot_ref, enc_w_ref, enc_b_ref, adjT0_ref, gumbel_ref,
    node_ids_ref, tile_eye_ref, q_ref, wfused_ref, bmsg_ref,
    wi_ref, bi_ref, bh_ref, death_w_ref, death_b_ref,
    # outputs
    hv_out_ref, order_ref, logp_ref,
    # scratch (VMEM-resident per-graph state)
    hv_ref, adjT_ref, alive_ref, alive_exp_ref, lhs_ref, rhs_ref,
):
    N = adjT0_ref.shape[0]
    D = enc_w_ref.shape[1]
    M = tile_eye_ref.shape[1]
    NM = N * M
    rounds = q_ref.shape[0]

    # ---- per-graph init: encode nodes, copy graph state into VMEM scratch ----
    hv_ref[...] = (jnp.dot(onehot_ref[...], enc_w_ref[...],
                           preferred_element_type=jnp.float32) + enc_b_ref[...])
    adjT_ref[...] = adjT0_ref[...]                       # adjT[j, i] = adj[i, j]
    alive_ref[...] = jnp.ones((1, N), jnp.float32)       # lane-dense alive mask
    alive_exp_ref[...] = jnp.ones((1, NM), jnp.float32)  # alive mask over q lanes
    rhs_ref[:NM, :] = tile_eye_ref[...]                  # static part of fused RHS

    lane_f = lax.broadcasted_iota(jnp.int32, (1, N), 1).astype(jnp.float32)
    lane_i = lax.broadcasted_iota(jnp.int32, (1, N), 1)
    row_ids = lax.broadcasted_iota(jnp.int32, (N, N), 0).astype(jnp.float32)
    col_ids = lax.broadcasted_iota(jnp.int32, (N, N), 1).astype(jnp.float32)
    node_ids = node_ids_ref[...]                          # [1, N*M] f32

    def _step(s, carry):
        order_row, logp = carry
        adjT = adjT_ref[...]              # [N,N] current (transposed) adjacency
        alive = alive_ref[...]            # [1,N]
        alive_exp = alive_exp_ref[...]    # [1,N*M]

        # step-invariant quantities (constant across the `rounds` inner loop)
        deg = jnp.sum(adjT, axis=1, keepdims=True)            # [N,1] in-degree
        num_edges = jnp.sum(deg, axis=0, keepdims=True)        # [1,1]
        has_edges = num_edges > 0.0                            # GraphProp no-op gate

        # per-step block of the fused LHS (current adjacency, bf16 for the MXU)
        lhs_ref[:, NM:] = adjT.astype(jnp.bfloat16)

        # ----------------------- GraphProp -----------------------
        for t in range(rounds):
            hv = hv_ref[...]
            # ONE fused MXU pass: hv @ [wsd | wh]  ->  msrc | mdst | gh_lin
            hvw = jnp.dot(hv.astype(jnp.bfloat16), wfused_ref[t],
                          preferred_element_type=jnp.float32)          # [N, 2M+3D]
            msrc = hvw[:, :M]
            mdst = hvw[:, M:2 * M]
            gh = hvw[:, 2 * M:] + bh_ref[t]

            # ONE fused MXU pass: [q[t]*alive | adjT] @ [tile_eye ; msrc]
            #   = edge_term + adjT @ msrc
            rhs_ref[NM:, :] = msrc.astype(jnp.bfloat16)
            lhs_ref[:, :NM] = (q_ref[t] * alive_exp).astype(jnp.bfloat16)
            s_edge = jnp.dot(lhs_ref[...], rhs_ref[...],
                             preferred_element_type=jnp.float32)        # [N, M]

            a = s_edge + deg * (mdst + bmsg_ref[t])                      # [N, M]

            # GRU gates (r|z|n), PyTorch GRUCell semantics (state kept in f32)
            gi = jnp.dot(a.astype(jnp.bfloat16), wi_ref[t],
                         preferred_element_type=jnp.float32) + bi_ref[t]
            rz = jax.nn.sigmoid(gi[:, :2 * D] + gh[:, :2 * D])
            r, z = rz[:, :D], rz[:, D:]
            n = jnp.tanh(gi[:, 2 * D:] + r * gh[:, 2 * D:])
            h_new = (1.0 - z) * n + z * hv
            hv_ref[...] = jnp.where(has_edges, h_new, hv)   # no-op if no edges

        # ------------------- ChooseVictimAgent (lane-dense) --------------------
        hv = hv_ref[...]
        logits = jnp.einsum("od,nd->on", death_w_ref[...], hv,
                            preferred_element_type=jnp.float32) + death_b_ref[...]  # [1,N]
        masked = jnp.where(alive > 0.0, logits, NEG_INF)      # softmax over alive nodes

        # Gumbel-max sample == Categorical(softmax(masked))
        score = masked + gumbel_ref[s]                         # [1,N]
        best = jnp.max(score, axis=1, keepdims=True)           # [1,1]
        victim = jnp.min(jnp.where(score >= best, lane_f, float(N)),
                         axis=1, keepdims=True)                # [1,1] victim node id
        v_onehot = (lane_f == victim).astype(jnp.float32)      # [1,N]

        # log prob of the sampled victim
        mmax = jnp.max(masked, axis=1, keepdims=True)
        lse = mmax + jnp.log(jnp.sum(jnp.exp(masked - mmax), axis=1, keepdims=True))
        v_logit = jnp.sum(masked * v_onehot, axis=1, keepdims=True)
        logp = logp + (v_logit - lse)

        # record victim; output order is already reversed (survivor goes to slot 0)
        order_row = order_row + jnp.where(lane_i == (N - 1 - s), victim, 0.0)

        # g.remove_nodes([victim]): mask the node and all incident edges
        alive_ref[...] = alive * (1.0 - v_onehot)
        alive_exp_ref[...] = alive_exp * (node_ids != victim).astype(jnp.float32)
        keep = ((row_ids != victim) & (col_ids != victim)).astype(jnp.float32)
        adjT_ref[...] = adjT * keep
        return order_row, logp

    order0 = jnp.zeros((1, N), jnp.float32)
    logp0 = jnp.zeros((1, 1), jnp.float32)
    order_row, logp = lax.fori_loop(0, N - 1, _step, (order0, logp0))

    # ------------------------------ outputs -----------------------------------
    alive = alive_ref[...]                                     # one-hot of survivor
    surv = jnp.sum(lane_f * alive, axis=1, keepdims=True)      # [1,1] survivor id
    order_row = order_row + jnp.where(lane_i == 0, surv, 0.0)
    order_ref[...] = order_row
    logp_ref[...] = logp
    hv_out_ref[...] = jnp.dot(alive, hv_ref[...],
                              preferred_element_type=jnp.float32)   # [1,D] survivor hv


# --------------------------- forward wrapper ---------------------------------

@jax.jit
def graph_destructor_forward(node_onehot, adj, he, params, key):
    """Destroys a batch of B independent graphs (B=1 reproduces the torch module)."""
    B, N, T = node_onehot.shape
    rounds, E, M = params["we"].shape
    D = params["enc_w"].shape[1]
    NM = N * M
    F = 2 * M + 3 * D

    # Gumbel noise for the (N-1) on-device categorical samples, lane-dense rows.
    u = jax.random.uniform(key, (B, N - 1, 1, N), jnp.float32, minval=1e-7, maxval=1.0)
    gumbel = -jnp.log(-jnp.log(u))

    # Graph-static, lane-dense edge-feature tensor built directly in output order:
    #   q[b, r, j, i*M+m] = adj[b, i, j] * (he[b, i, j] @ We_r)[m]
    adjT0 = jnp.transpose(adj, (0, 2, 1))                                   # [B, j, i]
    hew = jnp.einsum("bije,rem->brjim", he, params["we"])                   # [B,R,N,N,M]
    q = (adjT0[:, None, :, :, None] * hew).reshape(B, rounds, N, NM).astype(jnp.bfloat16)
    # TODO(synk): for large N (q exceeding scoped VMEM, ~N>=500 on v6e/v7x), pass q with
    # memory_space=pl.ANY and stream q[t] per round via double-buffered make_async_copy.

    tile_eye = jnp.tile(jnp.eye(M, dtype=jnp.float32), (N, 1)).astype(jnp.bfloat16)  # [N*M, M]
    node_ids = (jnp.arange(NM) // M).astype(jnp.float32).reshape(1, NM)

    # Fused per-round hv weights [wsd | wh] -> one [D, 2M+3D] MXU pass per round.
    wfused = jnp.concatenate([params["wsd"], params["wh"]], axis=-1).astype(jnp.bfloat16)
    wi = params["wi"].astype(jnp.bfloat16)

    def gspec(shape):      # per-graph input: batch dim blocked by 1 and squeezed
        return pl.BlockSpec((None,) + shape, lambda b, _s=shape: (b,) + (0,) * len(_s))

    def shared(shape):     # shared (broadcast) input: same whole-array block for all graphs
        return pl.BlockSpec(shape, lambda b, _s=shape: (0,) * len(_s))

    in_specs = [
        gspec((N, T)),                  # node_onehot
        shared((T, D)),                 # enc_w
        shared((1, D)),                 # enc_b
        gspec((N, N)),                  # adjT0
        gspec((N - 1, 1, N)),           # gumbel
        shared((1, NM)),                # node_ids
        shared((NM, M)),                # tile_eye
        gspec((rounds, N, NM)),         # q
        shared((rounds, D, F)),         # wfused
        shared((rounds, 1, M)),         # bmsg
        shared((rounds, M, 3 * D)),     # wi
        shared((rounds, 1, 3 * D)),     # bi
        shared((rounds, 1, 3 * D)),     # bh
        shared((1, D)),                 # death_w
        shared((1, 1)),                 # death_b
    ]
    out_specs = (gspec((1, D)), gspec((1, N)), gspec((1, 1)))
    out_shape = (jax.ShapeDtypeStruct((B, 1, D), jnp.float32),   # survivor hv
                 jax.ShapeDtypeStruct((B, 1, N), jnp.float32),   # victim order (reversed)
                 jax.ShapeDtypeStruct((B, 1, 1), jnp.float32))   # sum of log probs

    hv_final, order_f, logp = pl.pallas_call(
        _destructor_kernel,
        grid=(B,),
        out_shape=out_shape,
        in_specs=in_specs,
        out_specs=out_specs,
        scratch_shapes=[
            pltpu.VMEM((N, D), jnp.float32),         # hv
            pltpu.VMEM((N, N), jnp.float32),         # adjT (current graph)
            pltpu.VMEM((1, N), jnp.float32),         # alive mask (row layout)
            pltpu.VMEM((1, NM), jnp.float32),        # alive mask over q lanes
            pltpu.VMEM((N, NM + N), jnp.bfloat16),   # fused LHS  [q*alive | adjT]
            pltpu.VMEM((NM + N, M), jnp.bfloat16),   # fused RHS  [tile_eye ; msrc]
        ],
        compiler_params=pltpu.CompilerParams(
            dimension_semantics=("parallel",),        # graphs across TCs on v7x
            vmem_limit_bytes=32 * 1024 * 1024),
    )(node_onehot, params["enc_w"], params["enc_b"], adjT0, gumbel,
      node_ids, tile_eye, q, wfused, params["bmsg"],
      wi, params["bi"], params["bh"], params["death_w"], params["death_b"])

    return hv_final[:, 0, :], order_f[:, 0, :].astype(jnp.int32), logp[:, 0, 0]


# --------------------------- parameters --------------------------------------

def init_params(key, rounds, node_dim, msg_dim, edge_dim, num_node_types):
    D, M, E = node_dim, msg_dim, edge_dim
    ks = jax.random.split(key, 10)

    def rnd(k, shape):
        return 0.1 * jax.random.normal(k, shape, jnp.float32)

    w_msg = rnd(ks[0], (rounds, 2 * D + E, M))       # per-round nn.Linear(2D+E, M)
    return dict(
        enc_w=rnd(ks[1], (num_node_types, D)),       # initial_encoder
        enc_b=rnd(ks[2], (1, D)),
        death_w=rnd(ks[3], (1, D)),                  # choose_death (row layout)
        death_b=rnd(ks[4], (1, 1)),
        # (src|dst) message weights and edge-feature weights
        wsd=jnp.concatenate([w_msg[:, :D, :], w_msg[:, D:2 * D, :]], axis=-1),  # [R,D,2M]
        we=w_msg[:, 2 * D:, :],                                                 # [R,E,M]
        bmsg=rnd(ks[5], (rounds, 1, M)),
        # GRUCell(msg_dim, node_dim) weights, gate order (r|z|n)
        wi=rnd(ks[6], (rounds, M, 3 * D)),
        wh=rnd(ks[7], (rounds, D, 3 * D)),
        bi=rnd(ks[8], (rounds, 1, 3 * D)),
        bh=rnd(ks[9], (rounds, 1, 3 * D)),
    )


# --------------------------- demo --------------------------------------------

if __name__ == "__main__":
    B = 2                 # graphs (parallel grid axis -> 2 TCs on v7x)
    N = 8                 # nodes per graph
    rounds = 2
    node_dim = 32
    msg_dim = 16
    edge_dim = 4
    num_node_types = 5

    root = jax.random.PRNGKey(0)
    k_param, k_types, k_adj, k_he, k_sample = jax.random.split(root, 5)

    params = init_params(k_param, rounds, node_dim, msg_dim, edge_dim, num_node_types)

    node_types = jax.random.randint(k_types, (B, N), 0, num_node_types)
    node_onehot = jax.nn.one_hot(node_types, num_node_types, dtype=jnp.float32)  # g.ndata['out']

    adj = (jax.random.uniform(k_adj, (B, N, N)) < 0.4).astype(jnp.float32)
    adj = adj * (1.0 - jnp.eye(N, dtype=jnp.float32))                            # no self-loops
    he = jax.random.normal(k_he, (B, N, N, edge_dim), jnp.float32)               # edges.data['he']

    hv_final, victim_order, total_logp = graph_destructor_forward(
        node_onehot, adj, he, params, k_sample)
    jax.block_until_ready((hv_final, victim_order, total_logp))
    print("KERNEL_OK")
</pallas_src>

<mosaic_0001>
module attributes {stable_mosaic.version = 11 : i64} {
  func.func @_destructor_kernel(%arg0: i32, %arg1: memref<1x8x5xf32, #tpu.memory_space<vmem>>, %arg2: memref<5x32xf32, #tpu.memory_space<vmem>>, %arg3: memref<1x32xf32, #tpu.memory_space<vmem>>, %arg4: memref<1x8x8xf32, #tpu.memory_space<vmem>>, %arg5: memref<1x7x1x8xf32, #tpu.memory_space<vmem>>, %arg6: memref<1x128xf32, #tpu.memory_space<vmem>>, %arg7: memref<128x16xbf16, #tpu.memory_space<vmem>>, %arg8: memref<1x2x8x128xbf16, #tpu.memory_space<vmem>>, %arg9: memref<2x32x128xbf16, #tpu.memory_space<vmem>>, %arg10: memref<2x1x16xf32, #tpu.memory_space<vmem>>, %arg11: memref<2x16x96xbf16, #tpu.memory_space<vmem>>, %arg12: memref<2x1x96xf32, #tpu.memory_space<vmem>>, %arg13: memref<2x1x96xf32, #tpu.memory_space<vmem>>, %arg14: memref<1x32xf32, #tpu.memory_space<vmem>>, %arg15: memref<1x1xf32, #tpu.memory_space<vmem>>, %arg16: memref<1x1x32xf32, #tpu.memory_space<vmem>>, %arg17: memref<1x1x8xf32, #tpu.memory_space<vmem>>, %arg18: memref<1x1x1xf32, #tpu.memory_space<vmem>>, %arg19: memref<8x32xf32, #tpu.memory_space<vmem>>, %arg20: memref<8x8xf32, #tpu.memory_space<vmem>>, %arg21: memref<1x8xf32, #tpu.memory_space<vmem>>, %arg22: memref<1x128xf32, #tpu.memory_space<vmem>>, %arg23: memref<8x136xbf16, #tpu.memory_space<vmem>>, %arg24: memref<136x16xbf16, #tpu.memory_space<vmem>>) attributes {dimension_semantics = [#tpu.dimension_semantics<parallel>], iteration_bounds = array<i64: 2>, scalar_prefetch = 0 : i64, scratch_operands = 6 : i64, tpu.core_type = #tpu.core_type<tc>, window_params = [{transform_indices = @transform_0, window_bounds = array<i64: 1, 8, 5>}, {pipeline_mode = #tpu.pipeline_mode<synchronous>, transform_indices = @transform_1, window_bounds = array<i64: 5, 32>}, {pipeline_mode = #tpu.pipeline_mode<synchronous>, transform_indices = @transform_2, window_bounds = array<i64: 1, 32>}, {transform_indices = @transform_3, window_bounds = array<i64: 1, 8, 8>}, {transform_indices = @transform_4, window_bounds = array<i64: 1, 7, 1, 8>}, {pipeline_mode = #tpu.pipeline_mode<synchronous>, transform_indices = @transform_5, window_bounds = array<i64: 1, 128>}, {pipeline_mode = #tpu.pipeline_mode<synchronous>, transform_indices = @transform_6, window_bounds = array<i64: 128, 16>}, {transform_indices = @transform_7, window_bounds = array<i64: 1, 2, 8, 128>}, {pipeline_mode = #tpu.pipeline_mode<synchronous>, transform_indices = @transform_8, window_bounds = array<i64: 2, 32, 128>}, {pipeline_mode = #tpu.pipeline_mode<synchronous>, transform_indices = @transform_9, window_bounds = array<i64: 2, 1, 16>}, {pipeline_mode = #tpu.pipeline_mode<synchronous>, transform_indices = @transform_10, window_bounds = array<i64: 2, 16, 96>}, {pipeline_mode = #tpu.pipeline_mode<synchronous>, transform_indices = @transform_11, window_bounds = array<i64: 2, 1, 96>}, {pipeline_mode = #tpu.pipeline_mode<synchronous>, transform_indices = @transform_12, window_bounds = array<i64: 2, 1, 96>}, {pipeline_mode = #tpu.pipeline_mode<synchronous>, transform_indices = @transform_13, window_bounds = array<i64: 1, 32>}, {pipeline_mode = #tpu.pipeline_mode<synchronous>, transform_indices = @transform_14, window_bounds = array<i64: 1, 1>}, {transform_indices = @transform_15, window_bounds = array<i64: 1, 1, 32>}, {transform_indices = @transform_16, window_bounds = array<i64: 1, 1, 8>}, {transform_indices = @transform_17, window_bounds = array<i64: 1, 1, 1>}]} {
    %c0 = arith.constant 0 : index
    %c0_0 = arith.constant 0 : index
    %c0_1 = arith.constant 0 : index
    %0 = vector.load %arg1[%c0, %c0_0, %c0_1] : memref<1x8x5xf32, #tpu.memory_space<vmem>>, vector<1x8x5xf32>
    %1 = vector.shape_cast %0 : vector<1x8x5xf32> to vector<8x5xf32>
    %c0_2 = arith.constant 0 : index
    %c0_3 = arith.constant 0 : index
    %2 = vector.load %arg2[%c0_2, %c0_3] : memref<5x32xf32, #tpu.memory_space<vmem>>, vector<5x32xf32>
    %cst = arith.constant dense<0.000000e+00> : vector<8x32xf32>
    %3 = tpu.matmul %1, %2, %cst {dimension_numbers = #tpu.dot_dimension_numbers<[1], [0], [0], [1], [0, 0, 1, 1], [], []>} : vector<8x5xf32>, vector<5x32xf32>, vector<8x32xf32> -> vector<8x32xf32>
    %c0_4 = arith.constant 0 : index
    %c0_5 = arith.constant 0 : index
    %4 = vector.load %arg3[%c0_4, %c0_5] : memref<1x32xf32, #tpu.memory_space<vmem>>, vector<1x32xf32>
    %5 = vector.broadcast %4 : vector<1x32xf32> to vector<8x32xf32>
    %6 = arith.addf %3, %5 : vector<8x32xf32>
    %c0_6 = arith.constant 0 : index
    %c0_7 = arith.constant 0 : index
    %7 = vector.load %arg19[%c0_6, %c0_7] : memref<8x32xf32, #tpu.memory_space<vmem>>, vector<8x32xf32>
    tpu.vector_store %arg19[%c0_6, %c0_7], %6 {strides = array<i32>} : memref<8x32xf32, #tpu.memory_space<vmem>>, vector<8x32xf32>,
    %c0_8 = arith.constant 0 : index
    %c0_9 = arith.constant 0 : index
    %c0_10 = arith.constant 0 : index
    %8 = vector.load %arg4[%c0_8, %c0_9, %c0_10] : memref<1x8x8xf32, #tpu.memory_space<vmem>>, vector<1x8x8xf32>
    %9 = vector.shape_cast %8 : vector<1x8x8xf32> to vector<8x8xf32>
    %c0_11 = arith.constant 0 : index
    %c0_12 = arith.constant 0 : index
    %10 = vector.load %arg20[%c0_11, %c0_12] : memref<8x8xf32, #tpu.memory_space<vmem>>, vector<8x8xf32>
    tpu.vector_store %arg20[%c0_11, %c0_12], %9 {strides = array<i32>} : memref<8x8xf32, #tpu.memory_space<vmem>>, vector<8x8xf32>,
    %cst_13 = arith.constant 1.000000e+00 : f32
    %11 = vector.broadcast %cst_13 : f32 to vector<1x8xf32>
    %c0_14 = arith.constant 0 : index
    %c0_15 = arith.constant 0 : index
    %12 = vector.load %arg21[%c0_14, %c0_15] : memref<1x8xf32, #tpu.memory_space<vmem>>, vector<1x8xf32>
    tpu.vector_store %arg21[%c0_14, %c0_15], %11 {strides = array<i32>} : memref<1x8xf32, #tpu.memory_space<vmem>>, vector<1x8xf32>,
    %cst_16 = arith.constant 1.000000e+00 : f32
    %13 = vector.broadcast %cst_16 : f32 to vector<1x128xf32>
    %c0_17 = arith.constant 0 : index
    %c0_18 = arith.constant 0 : index
    %14 = vector.load %arg22[%c0_17, %c0_18] : memref<1x128xf32, #tpu.memory_space<vmem>>, vector<1x128xf32>
    tpu.vector_store %arg22[%c0_17, %c0_18], %13 {strides = array<i32>} : memref<1x128xf32, #tpu.memory_space<vmem>>, vector<1x128xf32>,
    %c0_19 = arith.constant 0 : index
    %c0_20 = arith.constant 0 : index
    %15 = vector.load %arg7[%c0_19, %c0_20] : memref<128x16xbf16, #tpu.memory_space<vmem>>, vector<128x16xbf16>
    %c0_21 = arith.constant 0 : index
    %c0_22 = arith.constant 0 : index
    %16 = vector.load %arg24[%c0_21, %c0_22] : memref<136x16xbf16, #tpu.memory_space<vmem>>, vector<128x16xbf16>
    tpu.vector_store %arg24[%c0_21, %c0_22], %15 {strides = array<i32>} : memref<136x16xbf16, #tpu.memory_space<vmem>>, vector<128x16xbf16>,
    %17 = tpu.iota {dimensions = array<i32: 1>} : vector<1x8xi32>
    %18 = arith.sitofp %17 : vector<1x8xi32> to vector<1x8xf32>
    %19 = tpu.iota {dimensions = array<i32: 1>} : vector<1x8xi32>
    %20 = tpu.iota {dimensions = array<i32: 0>} : vector<8x8xi32>
    %21 = arith.sitofp %20 : vector<8x8xi32> to vector<8x8xf32>
    %22 = tpu.iota {dimensions = array<i32: 1>} : vector<8x8xi32>
    %23 = arith.sitofp %22 : vector<8x8xi32> to vector<8x8xf32>
    %c0_23 = arith.constant 0 : index
    %c0_24 = arith.constant 0 : index
    %24 = vector.load %arg6[%c0_23, %c0_24] : memref<1x128xf32, #tpu.memory_space<vmem>>, vector<1x128xf32>
    %cst_25 = arith.constant 0.000000e+00 : f32
    %25 = vector.broadcast %cst_25 : f32 to vector<1x8xf32>
    %cst_26 = arith.constant 0.000000e+00 : f32
    %26 = vector.broadcast %cst_26 : f32 to vector<1x1xf32>
    %c0_i32 = arith.constant 0 : i32
    %c7_i32 = arith.constant 7 : i32
    %27 = arith.addi %c0_i32, %c7_i32 : i32
    %c1_i32 = arith.constant 1 : i32
    %28:2 = scf.for %arg25 = %c0_i32 to %27 step %c1_i32 iter_args(%arg26 = %25, %arg27 = %26) -> (vector<1x8xf32>, vector<1x1xf32>)  : i32 {
      %c0_45 = arith.constant 0 : index
      %c0_46 = arith.constant 0 : index
      %51 = vector.load %arg20[%c0_45, %c0_46] : memref<8x8xf32, #tpu.memory_space<vmem>>, vector<8x8xf32>
      %c0_47 = arith.constant 0 : index
      %c0_48 = arith.constant 0 : index
      %52 = vector.load %arg21[%c0_47, %c0_48] : memref<1x8xf32, #tpu.memory_space<vmem>>, vector<1x8xf32>
      %c0_49 = arith.constant 0 : index
      %c0_50 = arith.constant 0 : index
      %53 = vector.load %arg22[%c0_49, %c0_50] : memref<1x128xf32, #tpu.memory_space<vmem>>, vector<1x128xf32>
      %cst_51 = arith.constant dense<0.000000e+00> : vector<8xf32>
      %54 = vector.multi_reduction <add>, %51, %cst_51 [1] : vector<8x8xf32> to vector<8xf32>
      %55 = vector.shape_cast %54 : vector<8xf32> to vector<8x1xf32>
      %cst_52 = arith.constant dense<0.000000e+00> : vector<1xf32>
      %56 = vector.multi_reduction <add>, %55, %cst_52 [0] : vector<8x1xf32> to vector<1xf32>
      %57 = vector.shape_cast %56 : vector<1xf32> to vector<1x1xf32>
      %cst_53 = arith.constant 0.000000e+00 : f32
      %58 = vector.broadcast %cst_53 : f32 to vector<1x1xf32>
      %59 = arith.cmpf ogt, %57, %58 : vector<1x1xf32>
      %60 = arith.truncf %51 : vector<8x8xf32> to vector<8x8xbf16>
      %c0_54 = arith.constant 0 : index
      %c128 = arith.constant 128 : index
      %61 = vector.load %arg23[%c0_54, %c128] : memref<8x136xbf16, #tpu.memory_space<vmem>>, vector<8x8xbf16>
      tpu.vector_store %arg23[%c0_54, %c128], %60 {strides = array<i32>} : memref<8x136xbf16, #tpu.memory_space<vmem>>, vector<8x8xbf16>,
      %c0_55 = arith.constant 0 : index
      %c0_56 = arith.constant 0 : index
      %62 = vector.load %arg19[%c0_55, %c0_56] : memref<8x32xf32, #tpu.memory_space<vmem>>, vector<8x32xf32>
      %63 = arith.truncf %62 : vector<8x32xf32> to vector<8x32xbf16>
      %c0_57 = arith.constant 0 : index
      %c0_58 = arith.constant 0 : index
      %c0_59 = arith.constant 0 : index
      %64 = vector.load %arg9[%c0_57, %c0_58, %c0_59] : memref<2x32x128xbf16, #tpu.memory_space<vmem>>, vector<1x32x128xbf16>
      %65 = vector.shape_cast %64 : vector<1x32x128xbf16> to vector<32x128xbf16>
      %cst_60 = arith.constant dense<0.000000e+00> : vector<8x128xf32>
      %66 = tpu.matmul %63, %65, %cst_60 {dimension_numbers = #tpu.dot_dimension_numbers<[1], [0], [0], [1], [0, 0, 1, 1], [], []>} : vector<8x32xbf16>, vector<32x128xbf16>, vector<8x128xf32> -> vector<8x128xf32>
      %67 = vector.extract_strided_slice %66 {offsets = [0, 0], sizes = [8, 16], strides = [1, 1]} : vector<8x128xf32> to vector<8x16xf32>
      %68 = vector.extract_strided_slice %66 {offsets = [0, 16], sizes = [8, 16], strides = [1, 1]} : vector<8x128xf32> to vector<8x16xf32>
      %69 = vector.extract_strided_slice %66 {offsets = [0, 32], sizes = [8, 96], strides = [1, 1]} : vector<8x128xf32> to vector<8x96xf32>
      %c0_61 = arith.constant 0 : index
      %c0_62 = arith.constant 0 : index
      %c0_63 = arith.constant 0 : index
      %70 = vector.load %arg13[%c0_61, %c0_62, %c0_63] : memref<2x1x96xf32, #tpu.memory_space<vmem>>, vector<1x1x96xf32>
      %71 = vector.shape_cast %70 : vector<1x1x96xf32> to vector<1x96xf32>
      %72 = vector.broadcast %71 : vector<1x96xf32> to vector<8x96xf32>
      %73 = arith.addf %69, %72 : vector<8x96xf32>
      %74 = arith.truncf %67 : vector<8x16xf32> to vector<8x16xbf16>
      %c128_64 = arith.constant 128 : index
      %c0_65 = arith.constant 0 : index
      %75 = vector.load %arg24[%c128_64, %c0_65] : memref<136x16xbf16, #tpu.memory_space<vmem>>, vector<8x16xbf16>
      tpu.vector_store %arg24[%c128_64, %c0_65], %74 {strides = array<i32>} : memref<136x16xbf16, #tpu.memory_space<vmem>>, vector<8x16xbf16>,
      %c0_66 = arith.constant 0 : index
      %c0_67 = arith.constant 0 : index
      %c0_68 = arith.constant 0 : index
      %c0_69 = arith.constant 0 : index
      %76 = vector.load %arg8[%c0_66, %c0_67, %c0_68, %c0_69] : memref<1x2x8x128xbf16, #tpu.memory_space<vmem>>, vector<1x1x8x128xbf16>
      %77 = vector.shape_cast %76 : vector<1x1x8x128xbf16> to vector<8x128xbf16>
      %78 = arith.extf %77 : vector<8x128xbf16> to vector<8x128xf32>
      %79 = vector.broadcast %53 : vector<1x128xf32> to vector<8x128xf32>
      %80 = arith.mulf %78, %79 : vector<8x128xf32>
      %81 = arith.truncf %80 : vector<8x128xf32> to vector<8x128xbf16>
      %c0_70 = arith.constant 0 : index
      %c0_71 = arith.constant 0 : index
      %82 = vector.load %arg23[%c0_70, %c0_71] : memref<8x136xbf16, #tpu.memory_space<vmem>>, vector<8x128xbf16>
      tpu.vector_store %arg23[%c0_70, %c0_71], %81 {strides = array<i32>} : memref<8x136xbf16, #tpu.memory_space<vmem>>, vector<8x128xbf16>,
      %c0_72 = arith.constant 0 : index
      %c0_73 = arith.constant 0 : index
      %83 = vector.load %arg23[%c0_72, %c0_73] : memref<8x136xbf16, #tpu.memory_space<vmem>>, vector<8x136xbf16>
      %c0_74 = arith.constant 0 : index
      %c0_75 = arith.constant 0 : index
      %84 = vector.load %arg24[%c0_74, %c0_75] : memref<136x16xbf16, #tpu.memory_space<vmem>>, vector<136x16xbf16>
      %cst_76 = arith.constant dense<0.000000e+00> : vector<8x16xf32>
      %85 = tpu.matmul %83, %84, %cst_76 {dimension_numbers = #tpu.dot_dimension_numbers<[1], [0], [0], [1], [0, 0, 1, 1], [], []>} : vector<8x136xbf16>, vector<136x16xbf16>, vector<8x16xf32> -> vector<8x16xf32>
      %c0_77 = arith.constant 0 : index
      %c0_78 = arith.constant 0 : index
      %c0_79 = arith.constant 0 : index
      %86 = vector.load %arg10[%c0_77, %c0_78, %c0_79] : memref<2x1x16xf32, #tpu.memory_space<vmem>>, vector<1x1x16xf32>
      %87 = vector.shape_cast %86 : vector<1x1x16xf32> to vector<1x16xf32>
      %88 = vector.broadcast %87 : vector<1x16xf32> to vector<8x16xf32>
      %89 = arith.addf %68, %88 : vector<8x16xf32>
      %90 = vector.broadcast %55 : vector<8x1xf32> to vector<8x16xf32>
      %91 = arith.mulf %90, %89 : vector<8x16xf32>
      %92 = arith.addf %85, %91 : vector<8x16xf32>
      %93 = arith.truncf %92 : vector<8x16xf32> to vector<8x16xbf16>
      %c0_80 = arith.constant 0 : index
      %c0_81 = arith.constant 0 : index
      %c0_82 = arith.constant 0 : index
      %94 = vector.load %arg11[%c0_80, %c0_81, %c0_82] : memref<2x16x96xbf16, #tpu.memory_space<vmem>>, vector<1x16x96xbf16>
      %95 = vector.shape_cast %94 : vector<1x16x96xbf16> to vector<16x96xbf16>
      %cst_83 = arith.constant dense<0.000000e+00> : vector<8x96xf32>
      %96 = tpu.matmul %93, %95, %cst_83 {dimension_numbers = #tpu.dot_dimension_numbers<[1], [0], [0], [1], [0, 0, 1, 1], [], []>} : vector<8x16xbf16>, vector<16x96xbf16>, vector<8x96xf32> -> vector<8x96xf32>
      %c0_84 = arith.constant 0 : index
      %c0_85 = arith.constant 0 : index
      %c0_86 = arith.constant 0 : index
      %97 = vector.load %arg12[%c0_84, %c0_85, %c0_86] : memref<2x1x96xf32, #tpu.memory_space<vmem>>, vector<1x1x96xf32>
      %98 = vector.shape_cast %97 : vector<1x1x96xf32> to vector<1x96xf32>
      %99 = vector.broadcast %98 : vector<1x96xf32> to vector<8x96xf32>
      %100 = arith.addf %96, %99 : vector<8x96xf32>
      %101 = vector.extract_strided_slice %100 {offsets = [0, 0], sizes = [8, 64], strides = [1, 1]} : vector<8x96xf32> to vector<8x64xf32>
      %102 = vector.extract_strided_slice %73 {offsets = [0, 0], sizes = [8, 64], strides = [1, 1]} : vector<8x96xf32> to vector<8x64xf32>
      %103 = arith.addf %101, %102 : vector<8x64xf32>
      %104 = arith.negf %103 : vector<8x64xf32>
      %105 = math.exp %104 : vector<8x64xf32>
      %cst_87 = arith.constant 1.000000e+00 : f32
      %106 = vector.broadcast %cst_87 : f32 to vector<8x64xf32>
      %107 = arith.addf %106, %105 : vector<8x64xf32>
      %108 = arith.divf %106, %107 : vector<8x64xf32>
      %109 = vector.extract_strided_slice %108 {offsets = [0, 0], sizes = [8, 32], strides = [1, 1]} : vector<8x64xf32> to vector<8x32xf32>
      %110 = vector.extract_strided_slice %108 {offsets = [0, 32], sizes = [8, 32], strides = [1, 1]} : vector<8x64xf32> to vector<8x32xf32>
      %111 = vector.extract_strided_slice %100 {offsets = [0, 64], sizes = [8, 32], strides = [1, 1]} : vector<8x96xf32> to vector<8x32xf32>
      %112 = vector.extract_strided_slice %73 {offsets = [0, 64], sizes = [8, 32], strides = [1, 1]} : vector<8x96xf32> to vector<8x32xf32>
      %113 = arith.mulf %109, %112 : vector<8x32xf32>
      %114 = arith.addf %111, %113 : vector<8x32xf32>
      %115 = math.tanh %114 : vector<8x32xf32>
      %cst_88 = arith.constant 1.000000e+00 : f32
      %116 = vector.broadcast %cst_88 : f32 to vector<8x32xf32>
      %117 = arith.subf %116, %110 : vector<8x32xf32>
      %118 = arith.mulf %117, %115 : vector<8x32xf32>
      %119 = arith.mulf %110, %62 : vector<8x32xf32>
      %120 = arith.addf %118, %119 : vector<8x32xf32>
      %121 = vector.shape_cast %59 : vector<1x1xi1> to vector<1x1xi1>
      %122 = vector.broadcast %121 : vector<1x1xi1> to vector<8x32xi1>
      %123 = arith.select %122, %120, %62 : vector<8x32xi1>, vector<8x32xf32>
      %c0_89 = arith.constant 0 : index
      %c0_90 = arith.constant 0 : index
      %124 = vector.load %arg19[%c0_89, %c0_90] : memref<8x32xf32, #tpu.memory_space<vmem>>, vector<8x32xf32>
      tpu.vector_store %arg19[%c0_89, %c0_90], %123 {strides = array<i32>} : memref<8x32xf32, #tpu.memory_space<vmem>>, vector<8x32xf32>,
      %c0_91 = arith.constant 0 : index
      %c0_92 = arith.constant 0 : index
      %125 = vector.load %arg19[%c0_91, %c0_92] : memref<8x32xf32, #tpu.memory_space<vmem>>, vector<8x32xf32>
      %126 = arith.truncf %125 : vector<8x32xf32> to vector<8x32xbf16>
      %c1 = arith.constant 1 : index
      %c0_93 = arith.constant 0 : index
      %c0_94 = arith.constant 0 : index
      %127 = vector.load %arg9[%c1, %c0_93, %c0_94] : memref<2x32x128xbf16, #tpu.memory_space<vmem>>, vector<1x32x128xbf16>
      %128 = vector.shape_cast %127 : vector<1x32x128xbf16> to vector<32x128xbf16>
      %cst_95 = arith.constant dense<0.000000e+00> : vector<8x128xf32>
      %129 = tpu.matmul %126, %128, %cst_95 {dimension_numbers = #tpu.dot_dimension_numbers<[1], [0], [0], [1], [0, 0, 1, 1], [], []>} : vector<8x32xbf16>, vector<32x128xbf16>, vector<8x128xf32> -> vector<8x128xf32>
      %130 = vector.extract_strided_slice %129 {offsets = [0, 0], sizes = [8, 16], strides = [1, 1]} : vector<8x128xf32> to vector<8x16xf32>
      %131 = vector.extract_strided_slice %129 {offsets = [0, 16], sizes = [8, 16], strides = [1, 1]} : vector<8x128xf32> to vector<8x16xf32>
      %132 = vector.extract_strided_slice %129 {offsets = [0, 32], sizes = [8, 96], strides = [1, 1]} : vector<8x128xf32> to vector<8x96xf32>
      %c1_96 = arith.constant 1 : index
      %c0_97 = arith.constant 0 : index
      %c0_98 = arith.constant 0 : index
      %133 = vector.load %arg13[%c1_96, %c0_97, %c0_98] : memref<2x1x96xf32, #tpu.memory_space<vmem>>, vector<1x1x96xf32>
      %134 = vector.shape_cast %133 : vector<1x1x96xf32> to vector<1x96xf32>
      %135 = vector.broadcast %134 : vector<1x96xf32> to vector<8x96xf32>
      %136 = arith.addf %132, %135 : vector<8x96xf32>
      %137 = arith.truncf %130 : vector<8x16xf32> to vector<8x16xbf16>
      %c128_99 = arith.constant 128 : index
      %c0_100 = arith.constant 0 : index
      %138 = vector.load %arg24[%c128_99, %c0_100] : memref<136x16xbf16, #tpu.memory_space<vmem>>, vector<8x16xbf16>
      tpu.vector_store %arg24[%c128_99, %c0_100], %137 {strides = array<i32>} : memref<136x16xbf16, #tpu.memory_space<vmem>>, vector<8x16xbf16>,
      %c0_101 = arith.constant 0 : index
      %c1_102 = arith.constant 1 : index
      %c0_103 = arith.constant 0 : index
      %c0_104 = arith.constant 0 : index
      %139 = vector.load %arg8[%c0_101, %c1_102, %c0_103, %c0_104] : memref<1x2x8x128xbf16, #tpu.memory_space<vmem>>, vector<1x1x8x128xbf16>
      %140 = vector.shape_cast %139 : vector<1x1x8x128xbf16> to vector<8x128xbf16>
      %141 = arith.extf %140 : vector<8x128xbf16> to vector<8x128xf32>
      %142 = vector.broadcast %53 : vector<1x128xf32> to vector<8x128xf32>
      %143 = arith.mulf %141, %142 : vector<8x128xf32>
      %144 = arith.truncf %143 : vector<8x128xf32> to vector<8x128xbf16>
      %c0_105 = arith.constant 0 : index
      %c0_106 = arith.constant 0 : index
      %145 = vector.load %arg23[%c0_105, %c0_106] : memref<8x136xbf16, #tpu.memory_space<vmem>>, vector<8x128xbf16>
      tpu.vector_store %arg23[%c0_105, %c0_106], %144 {strides = array<i32>} : memref<8x136xbf16, #tpu.memory_space<vmem>>, vector<8x128xbf16>,
      %c0_107 = arith.constant 0 : index
      %c0_108 = arith.constant 0 : index
      %146 = vector.load %arg23[%c0_107, %c0_108] : memref<8x136xbf16, #tpu.memory_space<vmem>>, vector<8x136xbf16>
      %c0_109 = arith.constant 0 : index
      %c0_110 = arith.constant 0 : index
      %147 = vector.load %arg24[%c0_109, %c0_110] : memref<136x16xbf16, #tpu.memory_space<vmem>>, vector<136x16xbf16>
      %cst_111 = arith.constant dense<0.000000e+00> : vector<8x16xf32>
      %148 = tpu.matmul %146, %147, %cst_111 {dimension_numbers = #tpu.dot_dimension_numbers<[1], [0], [0], [1], [0, 0, 1, 1], [], []>} : vector<8x136xbf16>, vector<136x16xbf16>, vector<8x16xf32> -> vector<8x16xf32>
      %c1_112 = arith.constant 1 : index
      %c0_113 = arith.constant 0 : index
      %c0_114 = arith.constant 0 : index
      %149 = vector.load %arg10[%c1_112, %c0_113, %c0_114] : memref<2x1x16xf32, #tpu.memory_space<vmem>>, vector<1x1x16xf32>
      %150 = vector.shape_cast %149 : vector<1x1x16xf32> to vector<1x16xf32>
      %151 = vector.broadcast %150 : vector<1x16xf32> to vector<8x16xf32>
      %152 = arith.addf %131, %151 : vector<8x16xf32>
      %153 = vector.broadcast %55 : vector<8x1xf32> to vector<8x16xf32>
      %154 = arith.mulf %153, %152 : vector<8x16xf32>
      %155 = arith.addf %148, %154 : vector<8x16xf32>
      %156 = arith.truncf %155 : vector<8x16xf32> to vector<8x16xbf16>
      %c1_115 = arith.constant 1 : index
      %c0_116 = arith.constant 0 : index
      %c0_117 = arith.constant 0 : index
      %157 = vector.load %arg11[%c1_115, %c0_116, %c0_117] : memref<2x16x96xbf16, #tpu.memory_space<vmem>>, vector<1x16x96xbf16>
      %158 = vector.shape_cast %157 : vector<1x16x96xbf16> to vector<16x96xbf16>
      %cst_118 = arith.constant dense<0.000000e+00> : vector<8x96xf32>
      %159 = tpu.matmul %156, %158, %cst_118 {dimension_numbers = #tpu.dot_dimension_numbers<[1], [0], [0], [1], [0, 0, 1, 1], [], []>} : vector<8x16xbf16>, vector<16x96xbf16>, vector<8x96xf32> -> vector<8x96xf32>
      %c1_119 = arith.constant 1 : index
      %c0_120 = arith.constant 0 : index
      %c0_121 = arith.constant 0 : index
      %160 = vector.load %arg12[%c1_119, %c0_120, %c0_121] : memref<2x1x96xf32, #tpu.memory_space<vmem>>, vector<1x1x96xf32>
      %161 = vector.shape_cast %160 : vector<1x1x96xf32> to vector<1x96xf32>
      %162 = vector.broadcast %161 : vector<1x96xf32> to vector<8x96xf32>
      %163 = arith.addf %159, %162 : vector<8x96xf32>
      %164 = vector.extract_strided_slice %163 {offsets = [0, 0], sizes = [8, 64], strides = [1, 1]} : vector<8x96xf32> to vector<8x64xf32>
      %165 = vector.extract_strided_slice %136 {offsets = [0, 0], sizes = [8, 64], strides = [1, 1]} : vector<8x96xf32> to vector<8x64xf32>
      %166 = arith.addf %164, %165 : vector<8x64xf32>
      %167 = arith.negf %166 : vector<8x64xf32>
      %168 = math.exp %167 : vector<8x64xf32>
      %cst_122 = arith.constant 1.000000e+00 : f32
      %169 = vector.broadcast %cst_122 : f32 to vector<8x64xf32>
      %170 = arith.addf %169, %168 : vector<8x64xf32>
      %171 = arith.divf %169, %170 : vector<8x64xf32>
      %172 = vector.extract_strided_slice %171 {offsets = [0, 0], sizes = [8, 32], strides = [1, 1]} : vector<8x64xf32> to vector<8x32xf32>
      %173 = vector.extract_strided_slice %171 {offsets = [0, 32], sizes = [8, 32], strides = [1, 1]} : vector<8x64xf32> to vector<8x32xf32>
      %174 = vector.extract_strided_slice %163 {offsets = [0, 64], sizes = [8, 32], strides = [1, 1]} : vector<8x96xf32> to vector<8x32xf32>
      %175 = vector.extract_strided_slice %136 {offsets = [0, 64], sizes = [8, 32], strides = [1, 1]} : vector<8x96xf32> to vector<8x32xf32>
      %176 = arith.mulf %172, %175 : vector<8x32xf32>
      %177 = arith.addf %174, %176 : vector<8x32xf32>
      %178 = math.tanh %177 : vector<8x32xf32>
      %cst_123 = arith.constant 1.000000e+00 : f32
      %179 = vector.broadcast %cst_123 : f32 to vector<8x32xf32>
      %180 = arith.subf %179, %173 : vector<8x32xf32>
      %181 = arith.mulf %180, %178 : vector<8x32xf32>
      %182 = arith.mulf %173, %125 : vector<8x32xf32>
      %183 = arith.addf %181, %182 : vector<8x32xf32>
      %184 = vector.shape_cast %59 : vector<1x1xi1> to vector<1x1xi1>
      %185 = vector.broadcast %184 : vector<1x1xi1> to vector<8x32xi1>
      %186 = arith.select %185, %183, %125 : vector<8x32xi1>, vector<8x32xf32>
      %c0_124 = arith.constant 0 : index
      %c0_125 = arith.constant 0 : index
      %187 = vector.load %arg19[%c0_124, %c0_125] : memref<8x32xf32, #tpu.memory_space<vmem>>, vector<8x32xf32>
      tpu.vector_store %arg19[%c0_124, %c0_125], %186 {strides = array<i32>} : memref<8x32xf32, #tpu.memory_space<vmem>>, vector<8x32xf32>,
      %c0_126 = arith.constant 0 : index
      %c0_127 = arith.constant 0 : index
      %188 = vector.load %arg19[%c0_126, %c0_127] : memref<8x32xf32, #tpu.memory_space<vmem>>, vector<8x32xf32>
      %c0_128 = arith.constant 0 : index
      %c0_129 = arith.constant 0 : index
      %189 = vector.load %arg14[%c0_128, %c0_129] : memref<1x32xf32, #tpu.memory_space<vmem>>, vector<1x32xf32>
      "tpu.trace_start"() <{level = 10 : i32, message = "od,nd->on"}> : () -> ()
      %cst_130 = arith.constant dense<0.000000e+00> : vector<1x8xf32>
      %190 = tpu.matmul %189, %188, %cst_130 {dimension_numbers = #tpu.dot_dimension_numbers<[1], [1], [0], [0], [0, 0, 1, 0], [], []>} : vector<1x32xf32>, vector<8x32xf32>, vector<1x8xf32> -> vector<1x8xf32>
      "tpu.trace_stop"() : () -> ()
      %c0_131 = arith.constant 0 : index
      %c0_132 = arith.constant 0 : index
      %191 = vector.load %arg15[%c0_131, %c0_132] : memref<1x1xf32, #tpu.memory_space<vmem>>, vector<1x1xf32>
      %192 = vector.broadcast %191 : vector<1x1xf32> to vector<1x8xf32>
      %193 = arith.addf %190, %192 : vector<1x8xf32>
      %cst_133 = arith.constant 0.000000e+00 : f32
      %194 = vector.broadcast %cst_133 : f32 to vector<1x8xf32>
      %195 = arith.cmpf ogt, %52, %194 : vector<1x8xf32>
      %cst_134 = arith.constant -1.000000e+30 : f32
      %196 = vector.broadcast %cst_134 : f32 to vector<1x8xf32>
      %197 = arith.select %195, %193, %196 : vector<1x8xi1>, vector<1x8xf32>
      %c0_135 = arith.constant 0 : index
      %198 = arith.index_cast %arg25 : i32 to index
      %c0_136 = arith.constant 0 : index
      %c0_137 = arith.constant 0 : index
      %199 = vector.load %arg5[%c0_135, %198, %c0_136, %c0_137] : memref<1x7x1x8xf32, #tpu.memory_space<vmem>>, vector<1x1x1x8xf32>
      %200 = vector.shape_cast %199 : vector<1x1x1x8xf32> to vector<1x8xf32>
      %201 = arith.addf %197, %200 : vector<1x8xf32>
      %cst_138 = arith.constant dense<0xFF800000> : vector<1xf32>
      %202 = vector.multi_reduction <maximumf>, %201, %cst_138 [1] : vector<1x8xf32> to vector<1xf32>
      %203 = vector.shape_cast %202 : vector<1xf32> to vector<1x1xf32>
      %204 = vector.broadcast %203 : vector<1x1xf32> to vector<1x8xf32>
      %205 = arith.cmpf oge, %201, %204 : vector<1x8xf32>
      %cst_139 = arith.constant 8.000000e+00 : f32
      %206 = vector.broadcast %cst_139 : f32 to vector<1x8xf32>
      %207 = arith.select %205, %18, %206 : vector<1x8xi1>, vector<1x8xf32>
      %cst_140 = arith.constant dense<0x7F800000> : vector<1xf32>
      %208 = vector.multi_reduction <minimumf>, %207, %cst_140 [1] : vector<1x8xf32> to vector<1xf32>
      %209 = vector.shape_cast %208 : vector<1xf32> to vector<1x1xf32>
      %210 = vector.broadcast %209 : vector<1x1xf32> to vector<1x8xf32>
      %211 = arith.cmpf oeq, %18, %210 : vector<1x8xf32>
      %212 = arith.extui %211 : vector<1x8xi1> to vector<1x8xi32>
      %213 = arith.sitofp %212 : vector<1x8xi32> to vector<1x8xf32>
      %cst_141 = arith.constant dense<0xFF800000> : vector<1xf32>
      %214 = vector.multi_reduction <maximumf>, %197, %cst_141 [1] : vector<1x8xf32> to vector<1xf32>
      %215 = vector.shape_cast %214 : vector<1xf32> to vector<1x1xf32>
      %216 = vector.broadcast %215 : vector<1x1xf32> to vector<1x8xf32>
      %217 = arith.subf %197, %216 : vector<1x8xf32>
      %218 = math.exp %217 : vector<1x8xf32>
      %cst_142 = arith.constant dense<0.000000e+00> : vector<1xf32>
      %219 = vector.multi_reduction <add>, %218, %cst_142 [1] : vector<1x8xf32> to vector<1xf32>
      %220 = vector.shape_cast %219 : vector<1xf32> to vector<1x1xf32>
      %221 = math.log %220 : vector<1x1xf32>
      %222 = arith.addf %215, %221 : vector<1x1xf32>
      %223 = arith.mulf %197, %213 : vector<1x8xf32>
      %cst_143 = arith.constant dense<0.000000e+00> : vector<1xf32>
      %224 = vector.multi_reduction <add>, %223, %cst_143 [1] : vector<1x8xf32> to vector<1xf32>
      %225 = vector.shape_cast %224 : vector<1xf32> to vector<1x1xf32>
      %226 = arith.subf %225, %222 : vector<1x1xf32>
      %227 = arith.addf %arg27, %226 : vector<1x1xf32>
      %c7_i32_144 = arith.constant 7 : i32
      %228 = arith.subi %c7_i32_144, %arg25 : i32
      %229 = vector.broadcast %228 : i32 to vector<1x8xi32>
      %230 = arith.cmpi eq, %19, %229 : vector<1x8xi32>
      %cst_145 = arith.constant 0.000000e+00 : f32
      %231 = vector.shape_cast %209 : vector<1x1xf32> to vector<1x1xf32>
      %232 = vector.broadcast %231 : vector<1x1xf32> to vector<1x8xf32>
      %233 = vector.broadcast %cst_145 : f32 to vector<1x8xf32>
      %234 = arith.select %230, %232, %233 : vector<1x8xi1>, vector<1x8xf32>
      %235 = arith.addf %arg26, %234 : vector<1x8xf32>
      %cst_146 = arith.constant 1.000000e+00 : f32
      %236 = vector.broadcast %cst_146 : f32 to vector<1x8xf32>
      %237 = arith.subf %236, %213 : vector<1x8xf32>
      %238 = arith.mulf %52, %237 : vector<1x8xf32>
      %c0_147 = arith.constant 0 : index
      %c0_148 = arith.constant 0 : index
      %239 = vector.load %arg21[%c0_147, %c0_148] : memref<1x8xf32, #tpu.memory_space<vmem>>, vector<1x8xf32>
      tpu.vector_store %arg21[%c0_147, %c0_148], %238 {strides = array<i32>} : memref<1x8xf32, #tpu.memory_space<vmem>>, vector<1x8xf32>,
      %240 = vector.broadcast %209 : vector<1x1xf32> to vector<1x128xf32>
      %241 = arith.cmpf one, %24, %240 : vector<1x128xf32>
      %242 = arith.extui %241 : vector<1x128xi1> to vector<1x128xi32>
      %243 = arith.sitofp %242 : vector<1x128xi32> to vector<1x128xf32>
      %244 = arith.mulf %53, %243 : vector<1x128xf32>
      %c0_149 = arith.constant 0 : index
      %c0_150 = arith.constant 0 : index
      %245 = vector.load %arg22[%c0_149, %c0_150] : memref<1x128xf32, #tpu.memory_space<vmem>>, vector<1x128xf32>
      tpu.vector_store %arg22[%c0_149, %c0_150], %244 {strides = array<i32>} : memref<1x128xf32, #tpu.memory_space<vmem>>, vector<1x128xf32>,
      %246 = vector.broadcast %209 : vector<1x1xf32> to vector<8x8xf32>
      %247 = arith.cmpf one, %21, %246 : vector<8x8xf32>
      %248 = vector.broadcast %209 : vector<1x1xf32> to vector<8x8xf32>
      %249 = arith.cmpf one, %23, %248 : vector<8x8xf32>
      %250 = arith.andi %247, %249 : vector<8x8xi1>
      %251 = arith.extui %250 : vector<8x8xi1> to vector<8x8xi32>
      %252 = arith.sitofp %251 : vector<8x8xi32> to vector<8x8xf32>
      %253 = arith.mulf %51, %252 : vector<8x8xf32>
      %c0_151 = arith.constant 0 : index
      %c0_152 = arith.constant 0 : index
      %254 = vector.load %arg20[%c0_151, %c0_152] : memref<8x8xf32, #tpu.memory_space<vmem>>, vector<8x8xf32>
      tpu.vector_store %arg20[%c0_151, %c0_152], %253 {strides = array<i32>} : memref<8x8xf32, #tpu.memory_space<vmem>>, vector<8x8xf32>,
      scf.yield %235, %227 : vector<1x8xf32>, vector<1x1xf32>
    }
    %c7_i32_27 = arith.constant 7 : i32
    %c0_28 = arith.constant 0 : index
    %c0_29 = arith.constant 0 : index
    %29 = vector.load %arg21[%c0_28, %c0_29] : memref<1x8xf32, #tpu.memory_space<vmem>>, vector<1x8xf32>
    %30 = arith.mulf %18, %29 : vector<1x8xf32>
    %cst_30 = arith.constant dense<0.000000e+00> : vector<1xf32>
    %31 = vector.multi_reduction <add>, %30, %cst_30 [1] : vector<1x8xf32> to vector<1xf32>
    %32 = vector.shape_cast %31 : vector<1xf32> to vector<1x1xf32>
    %c0_i32_31 = arith.constant 0 : i32
    %33 = vector.broadcast %c0_i32_31 : i32 to vector<1x8xi32>
    %34 = arith.cmpi eq, %19, %33 : vector<1x8xi32>
    %cst_32 = arith.constant 0.000000e+00 : f32
    %35 = vector.shape_cast %32 : vector<1x1xf32> to vector<1x1xf32>
    %36 = vector.broadcast %35 : vector<1x1xf32> to vector<1x8xf32>
    %37 = vector.broadcast %cst_32 : f32 to vector<1x8xf32>
    %38 = arith.select %34, %36, %37 : vector<1x8xi1>, vector<1x8xf32>
    %39 = arith.addf %28#0, %38 : vector<1x8xf32>
    %c0_33 = arith.constant 0 : index
    %c0_34 = arith.constant 0 : index
    %c0_35 = arith.constant 0 : index
    %40 = vector.load %arg17[%c0_33, %c0_34, %c0_35] : memref<1x1x8xf32, #tpu.memory_space<vmem>>, vector<1x1x8xf32>
    %41 = vector.shape_cast %40 : vector<1x1x8xf32> to vector<1x8xf32>
    %42 = vector.shape_cast %39 : vector<1x8xf32> to vector<1x1x8xf32>
    tpu.vector_store %arg17[%c0_33, %c0_34, %c0_35], %42 {strides = array<i32>} : memref<1x1x8xf32, #tpu.memory_space<vmem>>, vector<1x1x8xf32>,
    %c0_36 = arith.constant 0 : index
    %c0_37 = arith.constant 0 : index
    %c0_38 = arith.constant 0 : index
    %43 = vector.load %arg18[%c0_36, %c0_37, %c0_38] : memref<1x1x1xf32, #tpu.memory_space<vmem>>, vector<1x1x1xf32>
    %44 = vector.shape_cast %43 : vector<1x1x1xf32> to vector<1x1xf32>
    %45 = vector.shape_cast %28#1 : vector<1x1xf32> to vector<1x1x1xf32>
    tpu.vector_store %arg18[%c0_36, %c0_37, %c0_38], %45 {strides = array<i32>} : memref<1x1x1xf32, #tpu.memory_space<vmem>>, vector<1x1x1xf32>,
    %c0_39 = arith.constant 0 : index
    %c0_40 = arith.constant 0 : index
    %46 = vector.load %arg19[%c0_39, %c0_40] : memref<8x32xf32, #tpu.memory_space<vmem>>, vector<8x32xf32>
    %cst_41 = arith.constant dense<0.000000e+00> : vector<1x32xf32>
    %47 = tpu.matmul %29, %46, %cst_41 {dimension_numbers = #tpu.dot_dimension_numbers<[1], [0], [0], [1], [0, 0, 1, 1], [], []>} : vector<1x8xf32>, vector<8x32xf32>, vector<1x32xf32> -> vector<1x32xf32>
    %c0_42 = arith.constant 0 : index
    %c0_43 = arith.constant 0 : index
    %c0_44 = arith.constant 0 : index
    %48 = vector.load %arg16[%c0_42, %c0_43, %c0_44] : memref<1x1x32xf32, #tpu.memory_space<vmem>>, vector<1x1x32xf32>
    %49 = vector.shape_cast %48 : vector<1x1x32xf32> to vector<1x32xf32>
    %50 = vector.shape_cast %47 : vector<1x32xf32> to vector<1x1x32xf32>
    tpu.vector_store %arg16[%c0_42, %c0_43, %c0_44], %50 {strides = array<i32>} : memref<1x1x32xf32, #tpu.memory_space<vmem>>, vector<1x1x32xf32>,
    return
  }
  func.func @transform_0(%arg0: i32) -> (i32, i32, i32) {
    %c0_i32 = arith.constant 0 : i32
    %c0_i32_0 = arith.constant 0 : i32
    %c0_i32_1 = arith.constant 0 : i32
    return %arg0, %c0_i32, %c0_i32_0 : i32, i32, i32
  }
  func.func @transform_1(%arg0: i32) -> (i32, i32) {
    %c0_i32 = arith.constant 0 : i32
    %c0_i32_0 = arith.constant 0 : i32
    %c0_i32_1 = arith.constant 0 : i32
    return %c0_i32, %c0_i32_0 : i32, i32
  }
  func.func @transform_2(%arg0: i32) -> (i32, i32) {
    %c0_i32 = arith.constant 0 : i32
    %c0_i32_0 = arith.constant 0 : i32
    %c0_i32_1 = arith.constant 0 : i32
    return %c0_i32, %c0_i32_0 : i32, i32
  }
  func.func @transform_3(%arg0: i32) -> (i32, i32, i32) {
    %c0_i32 = arith.constant 0 : i32
    %c0_i32_0 = arith.constant 0 : i32
    %c0_i32_1 = arith.constant 0 : i32
    return %arg0, %c0_i32, %c0_i32_0 : i32, i32, i32
  }
  func.func @transform_4(%arg0: i32) -> (i32, i32, i32, i32) {
    %c0_i32 = arith.constant 0 : i32
    %c0_i32_0 = arith.constant 0 : i32
    %c0_i32_1 = arith.constant 0 : i32
    %c0_i32_2 = arith.constant 0 : i32
    return %arg0, %c0_i32, %c0_i32_0, %c0_i32_1 : i32, i32, i32, i32
  }
  func.func @transform_5(%arg0: i32) -> (i32, i32) {
    %c0_i32 = arith.constant 0 : i32
    %c0_i32_0 = arith.constant 0 : i32
    %c0_i32_1 = arith.constant 0 : i32
    return %c0_i32, %c0_i32_0 : i32, i32
  }
  func.func @transform_6(%arg0: i32) -> (i32, i32) {
    %c0_i32 = arith.constant 0 : i32
    %c0_i32_0 = arith.constant 0 : i32
    %c0_i32_1 = arith.constant 0 : i32
    return %c0_i32, %c0_i32_0 : i32, i32
  }
  func.func @transform_7(%arg0: i32) -> (i32, i32, i32, i32) {
    %c0_i32 = arith.constant 0 : i32
    %c0_i32_0 = arith.constant 0 : i32
    %c0_i32_1 = arith.constant 0 : i32
    %c0_i32_2 = arith.constant 0 : i32
    return %arg0, %c0_i32, %c0_i32_0, %c0_i32_1 : i32, i32, i32, i32
  }
  func.func @transform_8(%arg0: i32) -> (i32, i32, i32) {
    %c0_i32 = arith.constant 0 : i32
    %c0_i32_0 = arith.constant 0 : i32
    %c0_i32_1 = arith.constant 0 : i32
    %c0_i32_2 = arith.constant 0 : i32
    return %c0_i32, %c0_i32_0, %c0_i32_1 : i32, i32, i32
  }
  func.func @transform_9(%arg0: i32) -> (i32, i32, i32) {
    %c0_i32 = arith.constant 0 : i32
    %c0_i32_0 = arith.constant 0 : i32
    %c0_i32_1 = arith.constant 0 : i32
    %c0_i32_2 = arith.constant 0 : i32
    return %c0_i32, %c0_i32_0, %c0_i32_1 : i32, i32, i32
  }
  func.func @transform_10(%arg0: i32) -> (i32, i32, i32) {
    %c0_i32 = arith.constant 0 : i32
    %c0_i32_0 = arith.constant 0 : i32
    %c0_i32_1 = arith.constant 0 : i32
    %c0_i32_2 = arith.constant 0 : i32
    return %c0_i32, %c0_i32_0, %c0_i32_1 : i32, i32, i32
  }
  func.func @transform_11(%arg0: i32) -> (i32, i32, i32) {
    %c0_i32 = arith.constant 0 : i32
    %c0_i32_0 = arith.constant 0 : i32
    %c0_i32_1 = arith.constant 0 : i32
    %c0_i32_2 = arith.constant 0 : i32
    return %c0_i32, %c0_i32_0, %c0_i32_1 : i32, i32, i32
  }
  func.func @transform_12(%arg0: i32) -> (i32, i32, i32) {
    %c0_i32 = arith.constant 0 : i32
    %c0_i32_0 = arith.constant 0 : i32
    %c0_i32_1 = arith.constant 0 : i32
    %c0_i32_2 = arith.constant 0 : i32
    return %c0_i32, %c0_i32_0, %c0_i32_1 : i32, i32, i32
  }
  func.func @transform_13(%arg0: i32) -> (i32, i32) {
    %c0_i32 = arith.constant 0 : i32
    %c0_i32_0 = arith.constant 0 : i32
    %c0_i32_1 = arith.constant 0 : i32
    return %c0_i32, %c0_i32_0 : i32, i32
  }
  func.func @transform_14(%arg0: i32) -> (i32, i32) {
    %c0_i32 = arith.constant 0 : i32
    %c0_i32_0 = arith.constant 0 : i32
    %c0_i32_1 = arith.constant 0 : i32
    return %c0_i32, %c0_i32_0 : i32, i32
  }
  func.func @transform_15(%arg0: i32) -> (i32, i32, i32) {
    %c0_i32 = arith.constant 0 : i32
    %c0_i32_0 = arith.constant 0 : i32
    %c0_i32_1 = arith.constant 0 : i32
    return %arg0, %c0_i32, %c0_i32_0 : i32, i32, i32
  }
  func.func @transform_16(%arg0: i32) -> (i32, i32, i32) {
    %c0_i32 = arith.constant 0 : i32
    %c0_i32_0 = arith.constant 0 : i32
    %c0_i32_1 = arith.constant 0 : i32
    return %arg0, %c0_i32, %c0_i32_0 : i32, i32, i32
  }
  func.func @transform_17(%arg0: i32) -> (i32, i32, i32) {
    %c0_i32 = arith.constant 0 : i32
    %c0_i32_0 = arith.constant 0 : i32
    %c0_i32_1 = arith.constant 0 : i32
    return %arg0, %c0_i32, %c0_i32_0 : i32, i32, i32
  }
}

</mosaic_0001>

<llo_original>
// kernel: graph_destructor_forward.1
$region0: #{graph_destructor_forward.1}
  #allocation0 [shape = 'u32[]', space=smem, size = 0x4, offset = 0x4, fixed_abs, tag = 'smem constant byte address 0x4 - core index']
  #allocation1 [shape = 'u32[144,128]{1,0:T(1,128)}', space=vmem, size = 0x12000, scoped, tag = 'internal scratch']
  #allocation2 [shape = 'f32[8,32]{1,0:T(8,128)}', space=vmem, size = 0x1000, scoped, tag = 'scratch operand']
  #allocation3 [shape = 'f32[8,8]{1,0:T(8,128)}', space=vmem, size = 0x1000, scoped, tag = 'scratch operand']
  #allocation4 [shape = 'f32[1,8]{1,0:T(1,128)}', space=vmem, size = 0x200, scoped, tag = 'scratch operand']
  #allocation5 [shape = 'f32[1,128]{1,0:T(1,128)}', space=vmem, size = 0x200, scoped, tag = 'scratch operand']
  #allocation6 [shape = 'bf16[8,136]{1,0:T(8,128)(2,1)}', space=vmem, size = 0x1000, scoped, tag = 'scratch operand']
  #allocation7 [shape = 'bf16[136,16]{1,0:T(8,128)(2,1)}', space=vmem, size = 0x8800, scoped, tag = 'scratch operand']
  #allocation8 [shape = 'f32[1,1]{1,0:T(1,128)S(1)}', space=vmem, size = 0x200, scoped, tag = 'scoped memory for graph_destructor_forward.1']
  %s0 = inlined_call_operand.vmem [shape: f32[2,8,5], index: 0, kind: input, shape index: {}]
  %s1 = inlined_call_operand.vmem [shape: f32[5,32], index: 1, kind: input, shape index: {}]
  %s2 = inlined_call_operand.vmem [shape: f32[1,32], index: 2, kind: input, shape index: {}]
  %s3 = inlined_call_operand.vmem [shape: f32[2,8,8], index: 3, kind: input, shape index: {}]
  %s4 = inlined_call_operand.vmem [shape: f32[2,7,1,8], index: 4, kind: input, shape index: {}]
  %s5 = inlined_call_operand.vmem [shape: f32[1,128], index: 5, kind: input, shape index: {}]
  %s6 = inlined_call_operand.vmem [shape: bf16[128,16], index: 6, kind: input, shape index: {}]
  %s7 = inlined_call_operand.vmem [shape: bf16[2,2,8,128], index: 7, kind: input, shape index: {}]
  %s8 = inlined_call_operand.vmem [shape: bf16[2,32,128], index: 8, kind: input, shape index: {}]
  %s9 = inlined_call_operand.vmem [shape: f32[2,1,16], index: 9, kind: input, shape index: {}]
  %s10 = inlined_call_operand.vmem [shape: bf16[2,16,96], index: 10, kind: input, shape index: {}]
  %s11 = inlined_call_operand.vmem [shape: f32[2,1,96], index: 11, kind: input, shape index: {}]
  %s12 = inlined_call_operand.vmem [shape: f32[2,1,96], index: 12, kind: input, shape index: {}]
  %s13 = inlined_call_operand.vmem [shape: f32[1,32], index: 13, kind: input, shape index: {}]
  %s14 = inlined_call_operand.<no memory space> [shape: f32[1,1], index: 14, kind: input, shape index: {}]
  %s15 = inlined_call_operand.hbm [shape: f32[2,1,32], index: 15, kind: output, shape index: {0}]
  %s16 = inlined_call_operand.vmem [shape: f32[2,1,8], index: 16, kind: output, shape index: {1}]
  %s17 = inlined_call_operand.vmem [shape: f32[2,1,1], index: 17, kind: output, shape index: {2}]
  %18 = xla_tuple %s15, %s16, %s17
  %s19 = sld [smem:[#allocation0]]
  $region116: #{graph_destructor_forward.1} parent=0
    _
  %s21 = ssub.s32 1, %s19
  %s22 = scalar_select 0, %s21, %s19
  %v23 = vstv %s14
  %24 = vst [vmem:[#allocation8] sm:$0x1] %v23
  $region1: #{graph_destructor_forward.1} parent=0
    #allocation9 [shape = 'u8[1024]{0}', space=vmem, size = 0x400, scoped, tag = 'output window, operand 0']
    #allocation10 [shape = 's32[2]{0}', space=sflag, size = 0x8, scoped, tag = 'scoped memory for graph_destructor_forward.1']
    %25 = vsyncpa [#allocation10], 0
    %s26 = scalar_lea.sflag [#allocation10], 1
    %27 = vsyncpa %s26, 0
    loop: start=0, step=1, limit=4
    $region2: #{graph_destructor_forward.1} parent=1 // loop_pre_header
      _
    $region3: #{graph_destructor_forward.1} parent=1 // loop_header
      %s29 = sphi 0, %s33
      %p30 = scmp.ge.s32.totalorder %s29, 4
      %s39 = sphi 0, %s41
      %s42 = sphi 0, %s39
      %s43 = sphi 0, %s42
      %s59 = sphi 0, %s43
      %s63 = sphi 0, %s63
      %s65 = sphi 0, %s63
      %s66 = sphi 0, %s65
      %s80 = sphi 0, %s66
      %s84 = sphi 0, %s84
      %s86 = sphi 0, %s84
      %s87 = sphi 0, %s86
      %s101 = sphi 0, %s87
      %s107 = sphi 0, %s109
      %s110 = sphi 0, %s107
      %s111 = sphi 0, %s110
      %s127 = sphi 0, %s111
      %s133 = sphi 0, %s135
      %s136 = sphi 0, %s133
      %s137 = sphi 0, %s136
      %s153 = sphi 0, %s137
      %s157 = sphi 0, %s157
      %s159 = sphi 0, %s157
      %s160 = sphi 0, %s159
      %s174 = sphi 0, %s160
      %s178 = sphi 0, %s178
      %s180 = sphi 0, %s178
      %s181 = sphi 0, %s180
      %s195 = sphi 0, %s181
      %s201 = sphi 0, %s203
      %s204 = sphi 0, %s201
      %s205 = sphi 0, %s204
      %s221 = sphi 0, %s205
      %s225 = sphi 0, %s225
      %s227 = sphi 0, %s225
      %s228 = sphi 0, %s227
      %s242 = sphi 0, %s228
      %s246 = sphi 0, %s246
      %s248 = sphi 0, %s246
      %s249 = sphi 0, %s248
      %s263 = sphi 0, %s249
      %s267 = sphi 0, %s267
      %s269 = sphi 0, %s267
      %s270 = sphi 0, %s269
      %s284 = sphi 0, %s270
      %s288 = sphi 0, %s288
      %s290 = sphi 0, %s288
      %s291 = sphi 0, %s290
      %s305 = sphi 0, %s291
      %s309 = sphi 0, %s309
      %s311 = sphi 0, %s309
      %s312 = sphi 0, %s311
      %s326 = sphi 0, %s312
      %s330 = sphi 0, %s330
      %s332 = sphi 0, %s330
      %s333 = sphi 0, %s332
      %s347 = sphi 0, %s333
      %s351 = sphi 0, %s351
      %s353 = sphi 0, %s351
      %s354 = sphi 0, %s353
      %s368 = sphi 0, %s354
      %s374 = sphi 0, %s376
      %s377 = sphi 0, %s374
      %s378 = sphi 0, %s377
      %s394 = sphi 0, %s378
      %s400 = sphi 0, %s402
      %s403 = sphi 0, %s400
      %s404 = sphi 0, %s403
      %s420 = sphi 0, %s404
      %s426 = sphi 0, %s428
      %s429 = sphi 0, %s426
      %s430 = sphi 0, %s429
      %s446 = sphi 0, %s430
    $region4: #{graph_destructor_forward.1} parent=1 // loop_header_branch
      %32 = sbr.rel (%p30) target = $region8
    $region5: #{graph_destructor_forward.1} parent=1 // loop_body
      %s34 = ssub.s32 %s29, 1
      %s35 = ssub.s32 %s29, 2
      %s36 = sadd.s32 %s29, 1
      %s37 = ssub.s32 %s29, %s36
      %p38 = scmp.eq.s32.totalorder %s37, 0
      %s40 = sadd.s32 %s39, 1
      %s41 = scalar_select %p38, %s39, %s40
      %p44 = pneg %p38
      %p45 = scmp.eq.s32.totalorder %s29, 1
      %p46 = por %p44, %p45
      %p47 = scmp.ne.s32.totalorder %s39, %s42
      %p48 = scmp.eq.s32.totalorder %s29, 0
      %p49 = por %p47, %p48
      %p50 = scmp.ne.s32.totalorder %s39, %s42
      %p51 = scmp.eq.s32.totalorder %s34, 1
      %p52 = por %p50, %p51
      %p53 = scmp.ne.s32.totalorder %s42, %s43
      %p54 = scmp.eq.s32.totalorder %s34, 0
      %p55 = por %p53, %p54
      %p56 = scmp.ne.s32.totalorder %s42, %s43
      %p57 = scmp.eq.s32.totalorder %s35, 1
      %p58 = por %p56, %p57
      %p60 = scmp.ne.s32.totalorder %s43, %s59
      %p61 = scmp.eq.s32.totalorder %s35, 0
      %p62 = por %p60, %p61
      %s64 = sadd.s32 %s63, 1
      %p67 = scmp.eq.s32.totalorder %s29, 1
      %p68 = scmp.ne.s32.totalorder %s63, %s65
      %p69 = scmp.eq.s32.totalorder %s29, 0
      %p70 = por %p68, %p69
      %p71 = scmp.ne.s32.totalorder %s63, %s65
      %p72 = scmp.eq.s32.totalorder %s34, 1
      %p73 = por %p71, %p72
      %p74 = scmp.ne.s32.totalorder %s65, %s66
      %p75 = scmp.eq.s32.totalorder %s34, 0
      %p76 = por %p74, %p75
      %p77 = scmp.ne.s32.totalorder %s65, %s66
      %p78 = scmp.eq.s32.totalorder %s35, 1
      %p79 = por %p77, %p78
      %p81 = scmp.ne.s32.totalorder %s66, %s80
      %p82 = scmp.eq.s32.totalorder %s35, 0
      %p83 = por %p81, %p82
      %s85 = sadd.s32 %s84, 1
      %p88 = scmp.eq.s32.totalorder %s29, 1
      %p89 = scmp.ne.s32.totalorder %s84, %s86
      %p90 = scmp.eq.s32.totalorder %s29, 0
      %p91 = por %p89, %p90
      %p92 = scmp.ne.s32.totalorder %s84, %s86
      %p93 = scmp.eq.s32.totalorder %s34, 1
      %p94 = por %p92, %p93
      %p95 = scmp.ne.s32.totalorder %s86, %s87
      %p96 = scmp.eq.s32.totalorder %s34, 0
      %p97 = por %p95, %p96
      %p98 = scmp.ne.s32.totalorder %s86, %s87
      %p99 = scmp.eq.s32.totalorder %s35, 1
      %p100 = por %p98, %p99
      %p102 = scmp.ne.s32.totalorder %s87, %s101
      %p103 = scmp.eq.s32.totalorder %s35, 0
      %p104 = por %p102, %p103
      %s105 = ssub.s32 %s29, %s36
      %p106 = scmp.eq.s32.totalorder %s105, 0
      %s108 = sadd.s32 %s107, 1
      %s109 = scalar_select %p106, %s107, %s108
      %p112 = pneg %p106
      %p113 = scmp.eq.s32.totalorder %s29, 1
      %p114 = por %p112, %p113
      %p115 = scmp.ne.s32.totalorder %s107, %s110
      %p116 = scmp.eq.s32.totalorder %s29, 0
      %p117 = por %p115, %p116
      %p118 = scmp.ne.s32.totalorder %s107, %s110
      %p119 = scmp.eq.s32.totalorder %s34, 1
      %p120 = por %p118, %p119
      %p121 = scmp.ne.s32.totalorder %s110, %s111
      %p122 = scmp.eq.s32.totalorder %s34, 0
      %p123 = por %p121, %p122
      %p124 = scmp.ne.s32.totalorder %s110, %s111
      %p125 = scmp.eq.s32.totalorder %s35, 1
      %p126 = por %p124, %p125
      %p128 = scmp.ne.s32.totalorder %s111, %s127
      %p129 = scmp.eq.s32.totalorder %s35, 0
      %p130 = por %p128, %p129
      %s131 = ssub.s32 %s29, %s36
      %p132 = scmp.eq.s32.totalorder %s131, 0
      %s134 = sadd.s32 %s133, 1
      %s135 = scalar_select %p132, %s133, %s134
      %p138 = pneg %p132
      %p139 = scmp.eq.s32.totalorder %s29, 1
      %p140 = por %p138, %p139
      %p141 = scmp.ne.s32.totalorder %s133, %s136
      %p142 = scmp.eq.s32.totalorder %s29, 0
      %p143 = por %p141, %p142
      %p144 = scmp.ne.s32.totalorder %s133, %s136
      %p145 = scmp.eq.s32.totalorder %s34, 1
      %p146 = por %p144, %p145
      %p147 = scmp.ne.s32.totalorder %s136, %s137
      %p148 = scmp.eq.s32.totalorder %s34, 0
      %p149 = por %p147, %p148
      %p150 = scmp.ne.s32.totalorder %s136, %s137
      %p151 = scmp.eq.s32.totalorder %s35, 1
      %p152 = por %p150, %p151
      %p154 = scmp.ne.s32.totalorder %s137, %s153
      %p155 = scmp.eq.s32.totalorder %s35, 0
      %p156 = por %p154, %p155
      %s158 = sadd.s32 %s157, 1
      %p161 = scmp.eq.s32.totalorder %s29, 1
      %p162 = scmp.ne.s32.totalorder %s157, %s159
      %p163 = scmp.eq.s32.totalorder %s29, 0
      %p164 = por %p162, %p163
      %p165 = scmp.ne.s32.totalorder %s157, %s159
      %p166 = scmp.eq.s32.totalorder %s34, 1
      %p167 = por %p165, %p166
      %p168 = scmp.ne.s32.totalorder %s159, %s160
      %p169 = scmp.eq.s32.totalorder %s34, 0
      %p170 = por %p168, %p169
      %p171 = scmp.ne.s32.totalorder %s159, %s160
      %p172 = scmp.eq.s32.totalorder %s35, 1
      %p173 = por %p171, %p172
      %p175 = scmp.ne.s32.totalorder %s160, %s174
      %p176 = scmp.eq.s32.totalorder %s35, 0
      %p177 = por %p175, %p176
      %s179 = sadd.s32 %s178, 1
      %p182 = scmp.eq.s32.totalorder %s29, 1
      %p183 = scmp.ne.s32.totalorder %s178, %s180
      %p184 = scmp.eq.s32.totalorder %s29, 0
      %p185 = por %p183, %p184
      %p186 = scmp.ne.s32.totalorder %s178, %s180
      %p187 = scmp.eq.s32.totalorder %s34, 1
      %p188 = por %p186, %p187
      %p189 = scmp.ne.s32.totalorder %s180, %s181
      %p190 = scmp.eq.s32.totalorder %s34, 0
      %p191 = por %p189, %p190
      %p192 = scmp.ne.s32.totalorder %s180, %s181
      %p193 = scmp.eq.s32.totalorder %s35, 1
      %p194 = por %p192, %p193
      %p196 = scmp.ne.s32.totalorder %s181, %s195
      %p197 = scmp.eq.s32.totalorder %s35, 0
      %p198 = por %p196, %p197
      %s199 = ssub.s32 %s29, %s36
      %p200 = scmp.eq.s32.totalorder %s199, 0
      %s202 = sadd.s32 %s201, 1
      %s203 = scalar_select %p200, %s201, %s202
      %p206 = pneg %p200
      %p207 = scmp.eq.s32.totalorder %s29, 1
      %p208 = por %p206, %p207
      %p209 = scmp.ne.s32.totalorder %s201, %s204
      %p210 = scmp.eq.s32.totalorder %s29, 0
      %p211 = por %p209, %p210
      %p212 = scmp.ne.s32.totalorder %s201, %s204
      %p213 = scmp.eq.s32.totalorder %s34, 1
      %p214 = por %p212, %p213
      %p215 = scmp.ne.s32.totalorder %s204, %s205
      %p216 = scmp.eq.s32.totalorder %s34, 0
      %p217 = por %p215, %p216
      %p218 = scmp.ne.s32.totalorder %s204, %s205
      %p219 = scmp.eq.s32.totalorder %s35, 1
      %p220 = por %p218, %p219
      %p222 = scmp.ne.s32.totalorder %s205, %s221
      %p223 = scmp.eq.s32.totalorder %s35, 0
      %p224 = por %p222, %p223
      %s226 = sadd.s32 %s225, 1
      %p229 = scmp.eq.s32.totalorder %s29, 1
      %p230 = scmp.ne.s32.totalorder %s225, %s227
      %p231 = scmp.eq.s32.totalorder %s29, 0
      %p232 = por %p230, %p231
      %p233 = scmp.ne.s32.totalorder %s225, %s227
      %p234 = scmp.eq.s32.totalorder %s34, 1
      %p235 = por %p233, %p234
      %p236 = scmp.ne.s32.totalorder %s227, %s228
      %p237 = scmp.eq.s32.totalorder %s34, 0
      %p238 = por %p236, %p237
      %p239 = scmp.ne.s32.totalorder %s227, %s228
      %p240 = scmp.eq.s32.totalorder %s35, 1
      %p241 = por %p239, %p240
      %p243 = scmp.ne.s32.totalorder %s228, %s242
      %p244 = scmp.eq.s32.totalorder %s35, 0
      %p245 = por %p243, %p244
      %s247 = sadd.s32 %s246, 1
      %p250 = scmp.eq.s32.totalorder %s29, 1
      %p251 = scmp.ne.s32.totalorder %s246, %s248
      %p252 = scmp.eq.s32.totalorder %s29, 0
      %p253 = por %p251, %p252
      %p254 = scmp.ne.s32.totalorder %s246, %s248
      %p255 = scmp.eq.s32.totalorder %s34, 1
      %p256 = por %p254, %p255
      %p257 = scmp.ne.s32.totalorder %s248, %s249
      %p258 = scmp.eq.s32.totalorder %s34, 0
      %p259 = por %p257, %p258
      %p260 = scmp.ne.s32.totalorder %s248, %s249
      %p261 = scmp.eq.s32.totalorder %s35, 1
      %p262 = por %p260, %p261
      %p264 = scmp.ne.s32.totalorder %s249, %s263
      %p265 = scmp.eq.s32.totalorder %s35, 0
      %p266 = por %p264, %p265
      %s268 = sadd.s32 %s267, 1
      %p271 = scmp.eq.s32.totalorder %s29, 1
      %p272 = scmp.ne.s32.totalorder %s267, %s269
      %p273 = scmp.eq.s32.totalorder %s29, 0
      %p274 = por %p272, %p273
      %p275 = scmp.ne.s32.totalorder %s267, %s269
      %p276 = scmp.eq.s32.totalorder %s34, 1
      %p277 = por %p275, %p276
      %p278 = scmp.ne.s32.totalorder %s269, %s270
      %p279 = scmp.eq.s32.totalorder %s34, 0
      %p280 = por %p278, %p279
      %p281 = scmp.ne.s32.totalorder %s269, %s270
      %p282 = scmp.eq.s32.totalorder %s35, 1
      %p283 = por %p281, %p282
      %p285 = scmp.ne.s32.totalorder %s270, %s284
      %p286 = scmp.eq.s32.totalorder %s35, 0
      %p287 = por %p285, %p286
      %s289 = sadd.s32 %s288, 1
      %p292 = scmp.eq.s32.totalorder %s29, 1
      %p293 = scmp.ne.s32.totalorder %s288, %s290
      %p294 = scmp.eq.s32.totalorder %s29, 0
      %p295 = por %p293, %p294
      %p296 = scmp.ne.s32.totalorder %s288, %s290
      %p297 = scmp.eq.s32.totalorder %s34, 1
      %p298 = por %p296, %p297
      %p299 = scmp.ne.s32.totalorder %s290, %s291
      %p300 = scmp.eq.s32.totalorder %s34, 0
      %p301 = por %p299, %p300
      %p302 = scmp.ne.s32.totalorder %s290, %s291
      %p303 = scmp.eq.s32.totalorder %s35, 1
      %p304 = por %p302, %p303
      %p306 = scmp.ne.s32.totalorder %s291, %s305
      %p307 = scmp.eq.s32.totalorder %s35, 0
      %p308 = por %p306, %p307
      %s310 = sadd.s32 %s309, 1
      %p313 = scmp.eq.s32.totalorder %s29, 1
      %p314 = scmp.ne.s32.totalorder %s309, %s311
      %p315 = scmp.eq.s32.totalorder %s29, 0
      %p316 = por %p314, %p315
      %p317 = scmp.ne.s32.totalorder %s309, %s311
      %p318 = scmp.eq.s32.totalorder %s34, 1
      %p319 = por %p317, %p318
      %p320 = scmp.ne.s32.totalorder %s311, %s312
      %p321 = scmp.eq.s32.totalorder %s34, 0
      %p322 = por %p320, %p321
      %p323 = scmp.ne.s32.totalorder %s311, %s312
      %p324 = scmp.eq.s32.totalorder %s35, 1
      %p325 = por %p323, %p324
      %p327 = scmp.ne.s32.totalorder %s312, %s326
      %p328 = scmp.eq.s32.totalorder %s35, 0
      %p329 = por %p327, %p328
      %s331 = sadd.s32 %s330, 1
      %p334 = scmp.eq.s32.totalorder %s29, 1
      %p335 = scmp.ne.s32.totalorder %s330, %s332
      %p336 = scmp.eq.s32.totalorder %s29, 0
      %p337 = por %p335, %p336
      %p338 = scmp.ne.s32.totalorder %s330, %s332
      %p339 = scmp.eq.s32.totalorder %s34, 1
      %p340 = por %p338, %p339
      %p341 = scmp.ne.s32.totalorder %s332, %s333
      %p342 = scmp.eq.s32.totalorder %s34, 0
      %p343 = por %p341, %p342
      %p344 = scmp.ne.s32.totalorder %s332, %s333
      %p345 = scmp.eq.s32.totalorder %s35, 1
      %p346 = por %p344, %p345
      %p348 = scmp.ne.s32.totalorder %s333, %s347
      %p349 = scmp.eq.s32.totalorder %s35, 0
      %p350 = por %p348, %p349
      %s352 = sadd.s32 %s351, 1
      %p355 = scmp.eq.s32.totalorder %s29, 1
      %p356 = scmp.ne.s32.totalorder %s351, %s353
      %p357 = scmp.eq.s32.totalorder %s29, 0
      %p358 = por %p356, %p357
      %p359 = scmp.ne.s32.totalorder %s351, %s353
      %p360 = scmp.eq.s32.totalorder %s34, 1
      %p361 = por %p359, %p360
      %p362 = scmp.ne.s32.totalorder %s353, %s354
      %p363 = scmp.eq.s32.totalorder %s34, 0
      %p364 = por %p362, %p363
      %p365 = scmp.ne.s32.totalorder %s353, %s354
      %p366 = scmp.eq.s32.totalorder %s35, 1
      %p367 = por %p365, %p366
      %p369 = scmp.ne.s32.totalorder %s354, %s368
      %p370 = scmp.eq.s32.totalorder %s35, 0
      %p371 = por %p369, %p370
      %s372 = ssub.s32 %s29, %s36
      %p373 = scmp.eq.s32.totalorder %s372, 0
      %s375 = sadd.s32 %s374, 1
      %s376 = scalar_select %p373, %s374, %s375
      %p379 = pneg %p373
      %p380 = scmp.eq.s32.totalorder %s29, 1
      %p381 = por %p379, %p380
      %p382 = scmp.ne.s32.totalorder %s374, %s377
      %p383 = scmp.eq.s32.totalorder %s29, 0
      %p384 = por %p382, %p383
      %p385 = scmp.ne.s32.totalorder %s374, %s377
      %p386 = scmp.eq.s32.totalorder %s34, 1
      %p387 = por %p385, %p386
      %p388 = scmp.ne.s32.totalorder %s377, %s378
      %p389 = scmp.eq.s32.totalorder %s34, 0
      %p390 = por %p388, %p389
      %p391 = scmp.ne.s32.totalorder %s377, %s378
      %p392 = scmp.eq.s32.totalorder %s35, 1
      %p393 = por %p391, %p392
      %p395 = scmp.ne.s32.totalorder %s378, %s394
      %p396 = scmp.eq.s32.totalorder %s35, 0
      %p397 = por %p395, %p396
      %s398 = ssub.s32 %s29, %s36
      %p399 = scmp.eq.s32.totalorder %s398, 0
      %s401 = sadd.s32 %s400, 1
      %s402 = scalar_select %p399, %s400, %s401
      %p405 = pneg %p399
      %p406 = scmp.eq.s32.totalorder %s29, 1
      %p407 = por %p405, %p406
      %p408 = scmp.ne.s32.totalorder %s400, %s403
      %p409 = scmp.eq.s32.totalorder %s29, 0
      %p410 = por %p408, %p409
      %p411 = scmp.ne.s32.totalorder %s400, %s403
      %p412 = scmp.eq.s32.totalorder %s34, 1
      %p413 = por %p411, %p412
      %p414 = scmp.ne.s32.totalorder %s403, %s404
      %p415 = scmp.eq.s32.totalorder %s34, 0
      %p416 = por %p414, %p415
      %p417 = scmp.ne.s32.totalorder %s403, %s404
      %p418 = scmp.eq.s32.totalorder %s35, 1
      %p419 = por %p417, %p418
      %p421 = scmp.ne.s32.totalorder %s404, %s420
      %p422 = scmp.eq.s32.totalorder %s35, 0
      %p423 = por %p421, %p422
      %s424 = ssub.s32 %s29, %s36
      %p425 = scmp.eq.s32.totalorder %s424, 0
      %s427 = sadd.s32 %s426, 1
      %s428 = scalar_select %p425, %s426, %s427
      %p431 = pneg %p425
      %p432 = scmp.eq.s32.totalorder %s29, 1
      %p433 = por %p431, %p432
      %p434 = scmp.ne.s32.totalorder %s426, %s429
      %p435 = scmp.eq.s32.totalorder %s29, 0
      %p436 = por %p434, %p435
      %p437 = scmp.ne.s32.totalorder %s426, %s429
      %p438 = scmp.eq.s32.totalorder %s34, 1
      %p439 = por %p437, %p438
      %p440 = scmp.ne.s32.totalorder %s429, %s430
      %p441 = scmp.eq.s32.totalorder %s34, 0
      %p442 = por %p440, %p441
      %p443 = scmp.ne.s32.totalorder %s429, %s430
      %p444 = scmp.eq.s32.totalorder %s35, 1
      %p445 = por %p443, %p444
      %p447 = scmp.ne.s32.totalorder %s430, %s446
      %p448 = scmp.eq.s32.totalorder %s35, 0
      %p449 = por %p447, %p448
      %p450 = scmp.le.s32.totalorder 1, %s29
      %p451 = scmp.lt.s32.totalorder %s29, 3
      %p452 = pnand %p450, %p451
      %p453 = pneg %p452
      // Predicated region
      $region9: #{graph_destructor_forward.1} parent=5 // pred_check
        _
      $region10: #{graph_destructor_forward.1} parent=5 // pred_check_branch
        %455 = sbr.rel (%p452) target = $region12
      $region11: #{graph_destructor_forward.1} parent=5 // pred_region
        %s456 = ssub.s32 %s29, 1
        // Predicated region
        $region13: #{graph_destructor_forward.1} parent=11 // pred_check
          %p457 = pneg %p76
        $region14: #{graph_destructor_forward.1} parent=11 // pred_check_branch
          %459 = sbr.rel (%p457) target = $region16
        $region15: #{graph_destructor_forward.1} parent=11 // pred_region
          _
        $region16: #{graph_destructor_forward.1} parent=11 // pred_fallthru
          _
        // Predicated region
        $region17: #{graph_destructor_forward.1} parent=11 // pred_check
          %p460 = pneg %p97
        $region18: #{graph_destructor_forward.1} parent=11 // pred_check_branch
          %462 = sbr.rel (%p460) target = $region20
        $region19: #{graph_destructor_forward.1} parent=11 // pred_region
          _
        $region20: #{graph_destructor_forward.1} parent=11 // pred_fallthru
          _
        // Predicated region
        $region21: #{graph_destructor_forward.1} parent=11 // pred_check
          %p463 = pneg %p170
        $region22: #{graph_destructor_forward.1} parent=11 // pred_check_branch
          %465 = sbr.rel (%p463) target = $region24
        $region23: #{graph_destructor_forward.1} parent=11 // pred_region
          _
        $region24: #{graph_destructor_forward.1} parent=11 // pred_fallthru
          _
        // Predicated region
        $region25: #{graph_destructor_forward.1} parent=11 // pred_check
          %p466 = pneg %p191
        $region26: #{graph_destructor_forward.1} parent=11 // pred_check_branch
          %468 = sbr.rel (%p466) target = $region28
        $region27: #{graph_destructor_forward.1} parent=11 // pred_region
          _
        $region28: #{graph_destructor_forward.1} parent=11 // pred_fallthru
          _
        // Predicated region
        $region29: #{graph_destructor_forward.1} parent=11 // pred_check
          %p469 = pneg %p238
        $region30: #{graph_destructor_forward.1} parent=11 // pred_check_branch
          %471 = sbr.rel (%p469) target = $region32
        $region31: #{graph_destructor_forward.1} parent=11 // pred_region
          _
        $region32: #{graph_destructor_forward.1} parent=11 // pred_fallthru
          _
        // Predicated region
        $region33: #{graph_destructor_forward.1} parent=11 // pred_check
          %p472 = pneg %p259
        $region34: #{graph_destructor_forward.1} parent=11 // pred_check_branch
          %474 = sbr.rel (%p472) target = $region36
        $region35: #{graph_destructor_forward.1} parent=11 // pred_region
          _
        $region36: #{graph_destructor_forward.1} parent=11 // pred_fallthru
          _
        // Predicated region
        $region37: #{graph_destructor_forward.1} parent=11 // pred_check
          %p475 = pneg %p280
        $region38: #{graph_destructor_forward.1} parent=11 // pred_check_branch
          %477 = sbr.rel (%p475) target = $region40
        $region39: #{graph_destructor_forward.1} parent=11 // pred_region
          _
        $region40: #{graph_destructor_forward.1} parent=11 // pred_fallthru
          _
        // Predicated region
        $region41: #{graph_destructor_forward.1} parent=11 // pred_check
          %p478 = pneg %p301
        $region42: #{graph_destructor_forward.1} parent=11 // pred_check_branch
          %480 = sbr.rel (%p478) target = $region44
        $region43: #{graph_destructor_forward.1} parent=11 // pred_region
          _
        $region44: #{graph_destructor_forward.1} parent=11 // pred_fallthru
          _
        // Predicated region
        $region45: #{graph_destructor_forward.1} parent=11 // pred_check
          %p481 = pneg %p322
        $region46: #{graph_destructor_forward.1} parent=11 // pred_check_branch
          %483 = sbr.rel (%p481) target = $region48
        $region47: #{graph_destructor_forward.1} parent=11 // pred_region
          _
        $region48: #{graph_destructor_forward.1} parent=11 // pred_fallthru
          _
        // Predicated region
        $region49: #{graph_destructor_forward.1} parent=11 // pred_check
          %p484 = pneg %p343
        $region50: #{graph_destructor_forward.1} parent=11 // pred_check_branch
          %486 = sbr.rel (%p484) target = $region52
        $region51: #{graph_destructor_forward.1} parent=11 // pred_region
          _
        $region52: #{graph_destructor_forward.1} parent=11 // pred_fallthru
          _
        // Predicated region
        $region53: #{graph_destructor_forward.1} parent=11 // pred_check
          %p487 = pneg %p364
        $region54: #{graph_destructor_forward.1} parent=11 // pred_check_branch
          %489 = sbr.rel (%p487) target = $region56
        $region55: #{graph_destructor_forward.1} parent=11 // pred_region
          _
        $region56: #{graph_destructor_forward.1} parent=11 // pred_fallthru
          _
      $region12: #{graph_destructor_forward.1} parent=5 // pred_fallthru
        _
      %p490 = scmp.lt.s32.totalorder %s29, 2
      // Predicated region
      $region57: #{graph_destructor_forward.1} parent=5 // pred_check
        %p491 = pneg %p490
      $region58: #{graph_destructor_forward.1} parent=5 // pred_check_branch
        %493 = sbr.rel (%p491) target = $region60
      $region59: #{graph_destructor_forward.1} parent=5 // pred_region
        // Predicated region
        $region61: #{graph_destructor_forward.1} parent=59 // pred_check
          %p494 = pneg %p49
        $region62: #{graph_destructor_forward.1} parent=59 // pred_check_branch
          %496 = sbr.rel (%p494) target = $region64
        $region63: #{graph_destructor_forward.1} parent=59 // pred_region
          %p497 = scmp.lt.s32.totalorder %s29, 1
          %s498 = scalar_select %p497, %s29, 1
          %s499 = smul.addr %s498, 8
          %s500 = scalar_lea.vmem %s0, %s499
        $region64: #{graph_destructor_forward.1} parent=59 // pred_fallthru
          _
        // Predicated region
        $region65: #{graph_destructor_forward.1} parent=59 // pred_check
          %p501 = pneg %p117
        $region66: #{graph_destructor_forward.1} parent=59 // pred_check_branch
          %503 = sbr.rel (%p501) target = $region68
        $region67: #{graph_destructor_forward.1} parent=59 // pred_region
          %p504 = scmp.lt.s32.totalorder %s29, 1
          %s505 = scalar_select %p504, %s29, 1
          %s506 = smul.addr %s505, 8
          %s507 = scalar_lea.vmem %s3, %s506
        $region68: #{graph_destructor_forward.1} parent=59 // pred_fallthru
          _
        // Predicated region
        $region69: #{graph_destructor_forward.1} parent=59 // pred_check
          %p508 = pneg %p143
        $region70: #{graph_destructor_forward.1} parent=59 // pred_check_branch
          %510 = sbr.rel (%p508) target = $region72
        $region71: #{graph_destructor_forward.1} parent=59 // pred_region
          %p511 = scmp.lt.s32.totalorder %s29, 1
          %s512 = scalar_select %p511, %s29, 1
          %s513 = smul.addr %s512, 7
          %s514 = scalar_lea.vmem %s4, %s513
        $region72: #{graph_destructor_forward.1} parent=59 // pred_fallthru
          _
        // Predicated region
        $region73: #{graph_destructor_forward.1} parent=59 // pred_check
          %p515 = pneg %p211
        $region74: #{graph_destructor_forward.1} parent=59 // pred_check_branch
          %517 = sbr.rel (%p515) target = $region76
        $region75: #{graph_destructor_forward.1} parent=59 // pred_region
          %p518 = scmp.lt.s32.totalorder %s29, 1
          %s519 = scalar_select %p518, %s29, 1
          %s520 = smul.addr %s519, 2
          %s521 = smul.addr %s520, 4
          %s522 = scalar_lea.vmem %s7, %s521
        $region76: #{graph_destructor_forward.1} parent=59 // pred_fallthru
          _
      $region60: #{graph_destructor_forward.1} parent=5 // pred_fallthru
        _
      %p523 = scmp.le.s32.totalorder 1, %s29
      %p524 = scmp.lt.s32.totalorder %s29, 3
      %p525 = pnand %p523, %p524
      %p526 = pneg %p525
      // Predicated region
      $region77: #{graph_destructor_forward.1} parent=5 // pred_check
        _
      $region78: #{graph_destructor_forward.1} parent=5 // pred_check_branch
        %528 = sbr.rel (%p525) target = $region80
      $region79: #{graph_destructor_forward.1} parent=5 // pred_region
        %s529 = ssub.s32 %s29, 1
        %p530 = scmp.lt.s32.totalorder %s34, 1
        %s531 = scalar_select %p530, %s34, 1
        %s532 = smul.addr %s531, 8
        %s533 = scalar_lea.vmem %s0, %s532
        %p534 = pneg %p55
        %p535 = pneg %p52
        %p536 = pneg %p76
        %p537 = pneg %p73
        %p538 = pneg %p97
        %p539 = pneg %p94
        %p540 = scmp.lt.s32.totalorder %s34, 1
        %s541 = scalar_select %p540, %s34, 1
        %s542 = smul.addr %s541, 8
        %s543 = scalar_lea.vmem %s3, %s542
        %p544 = pneg %p123
        %p545 = pneg %p120
        %p546 = scmp.lt.s32.totalorder %s34, 1
        %s547 = scalar_select %p546, %s34, 1
        %s548 = smul.addr %s547, 7
        %s549 = scalar_lea.vmem %s4, %s548
        %p550 = pneg %p149
        %p551 = pneg %p146
        %p552 = pneg %p170
        %p553 = pneg %p167
        %p554 = pneg %p191
        %p555 = pneg %p188
        %p556 = scmp.lt.s32.totalorder %s34, 1
        %s557 = scalar_select %p556, %s34, 1
        %s558 = smul.addr %s557, 2
        %s559 = smul.addr %s558, 4
        %s560 = scalar_lea.vmem %s7, %s559
        %p561 = pneg %p217
        %p562 = pneg %p214
        %p563 = pneg %p238
        %p564 = pneg %p235
        %p565 = pneg %p259
        %p566 = pneg %p256
        %p567 = pneg %p280
        %p568 = pneg %p277
        %p569 = pneg %p301
        %p570 = pneg %p298
        %p571 = pneg %p322
        %p572 = pneg %p319
        %p573 = pneg %p343
        %p574 = pneg %p340
        %p575 = pneg %p364
        %p576 = pneg %p361
        %p577 = pneg %p390
        %p578 = pneg %p387
        %s579 = sand.u32 %s377, 1
        %s580 = scalar_lea.sflag [#allocation10], %s579
        %s581 = sand.u32 %s377, 1
        %s582 = scalar_lea.vmem [#allocation9], %s581
        %p583 = pneg %p416
        %p584 = pneg %p413
        %p585 = scmp.lt.s32.totalorder %s34, 1
        %s586 = scalar_select %p585, %s34, 1
        %s587 = scalar_lea.vmem %s16, %s586
        %p588 = pneg %p442
        %p589 = pneg %p439
        %p590 = scmp.lt.s32.totalorder %s34, 1
        %s591 = scalar_select %p590, %s34, 1
        %s592 = scalar_lea.vmem %s17, %s591
        %p593 = scmp.lt.s32.totalorder %s34, 1
        %s594 = scalar_select %p593, %s34, 1
        %s595 = smul.addr %s594, 8
        %s596 = scalar_lea.vmem %s0, %s595
        %p597 = scmp.lt.s32.totalorder %s34, 1
        %s598 = scalar_select %p597, %s34, 1
        %s599 = smul.addr %s598, 8
        %s600 = scalar_lea.vmem %s3, %s599
        %p601 = scmp.lt.s32.totalorder %s34, 1
        %s602 = scalar_select %p601, %s34, 1
        %s603 = smul.addr %s602, 7
        %s604 = scalar_lea.vmem %s4, %s603
        %p605 = scmp.lt.s32.totalorder %s34, 1
        %s606 = scalar_select %p605, %s34, 1
        %s607 = smul.addr %s606, 2
        %s608 = smul.addr %s607, 4
        %s609 = scalar_lea.vmem %s7, %s608
        %p610 = scmp.lt.s32.totalorder %s34, 1
        %s611 = scalar_select %p610, %s34, 1
        %s612 = scalar_lea.vmem %s16, %s611
        %p613 = scmp.lt.s32.totalorder %s34, 1
        %s614 = scalar_select %p613, %s34, 1
        %s615 = scalar_lea.vmem %s17, %s614
        %v617 = vld [vmem:[%s596] sm:$0xff]
        %v618 = vld [vmem:[%s1] sm:$0x1f]
        %v619 = vld [vmem:[%s2] sm:$0x1]
        %v621 = vlaneseq
        %v622 = vshrl.u32 %v621, 7
        %v623 = vsub.s32 0, %v622
        %v624 = vrot.slane %v619, %v623
        %vm626 = vcmask 39936
        %v628 = vsel %vm626, %v617, 0
        %vm630 = vcmask 1044480
        %v632 = vsel %vm630, %v618, 0
        %634 = vmatprep.subr.mxu0 0.0
        %635 = vmatpush1.msra.mxu0 %v632
        %636 = vmatprep.subr.mxu0 0.0
        %637 = vmatpush1.msra.mxu0 0.0
        %638 = vmatprep.subr.mxu0 0.0
        %639 = vmatpush1.msra.mxu0 0.0
        %640 = vmatprep.subr.mxu0 0.0
        %641 = vmatpush1.msra.mxu0 0.0
        %642 = vmatprep.subr.mxu0 0.0
        %643 = vmatpush1.msra.mxu0 0.0
        %644 = vmatprep.subr.mxu0 0.0
        %645 = vmatpush1.msra.mxu0 0.0
        %646 = vmatprep.subr.mxu0 0.0
        %647 = vmatpush1.msra.mxu0 0.0
        %648 = vmatprep.subr.mxu0 0.0
        %649 = vmatpush1.msra.mxu0 0.0
        %650 = vmatprep.subr.mxu0 0.0
        %651 = vmatpush1.msra.mxu0 0.0
        %652 = vmatprep.subr.mxu0 0.0
        %653 = vmatpush1.msra.mxu0 0.0
        %654 = vmatprep.subr.mxu0 0.0
        %655 = vmatpush1.msra.mxu0 0.0
        %656 = vmatprep.subr.mxu0 0.0
        %657 = vmatpush1.msra.mxu0 0.0
        %658 = vmatprep.subr.mxu0 0.0
        %659 = vmatpush1.msra.mxu0 0.0
        %660 = vmatprep.subr.mxu0 0.0
        %661 = vmatpush1.msra.mxu0 0.0
        %662 = vmatprep.subr.mxu0 0.0
        %663 = vmatpush1.msra.mxu0 0.0
        %664 = vmatprep.subr.mxu0 0.0
        %665 = vmatpush1.msra.mxu0 0.0
        %666 = vmatprep.subr.mxu0 0.0
        %667 = vmatpush1.msra.mxu0 0.0
        %668 = vmatprep.subr.mxu0 0.0
        %669 = vmatpush1.msra.mxu0 0.0
        %670 = vmatprep.subr.mxu0 0.0
        %671 = vmatpush1.msra.mxu0 0.0
        %672 = vmatprep.subr.mxu0 0.0
        %673 = vmatpush1.msra.mxu0 0.0
        %674 = vmatprep.subr.mxu0 0.0
        %675 = vmatpush1.msra.mxu0 0.0
        %676 = vmatprep.subr.mxu0 0.0
        %677 = vmatpush1.msra.mxu0 0.0
        %678 = vmatprep.subr.mxu0 0.0
        %679 = vmatpush1.msra.mxu0 0.0
        %680 = vmatprep.subr.mxu0 0.0
        %681 = vmatpush1.msra.mxu0 0.0
        %682 = vmatprep.subr.mxu0 0.0
        %683 = vmatpush1.msra.mxu0 0.0
        %684 = vmatprep.subr.mxu0 0.0
        %685 = vmatpush1.msra.mxu0 0.0
        %686 = vmatprep.subr.mxu0 0.0
        %687 = vmatpush1.msra.mxu0 0.0
        %688 = vmatprep.subr.mxu0 0.0
        %689 = vmatpush1.msra.mxu0 0.0
        %690 = vmatprep.subr.mxu0 0.0
        %691 = vmatpush1.msra.mxu0 0.0
        %692 = vmatprep.subr.mxu0 0.0
        %693 = vmatpush1.msra.mxu0 0.0
        %694 = vmatprep.subr.mxu0 0.0
        %695 = vmatpush1.msra.mxu0 0.0
        %696 = vmatprep.subr.mxu0 0.0
        %697 = vmatpush1.msra.mxu0 0.0
        %698 = vmatprep.mubr.f32.mxu0 0.0
        %699 = vmatmul.mubr.f32.gmra.mrb[0].mxu0 %v628
        %v700 = vpop.f32.mrb[0].mxu0
        %v701 = vadd.f32 %v624, %v700
        %v702 = vpop.f32.mrb[0].mxu0
        %703 = vdwg.mxu0
        %vm704 = vcmask 261120
        %705 = vst.msk [vmem:[#allocation2] sm:$0xff] %vm704, %v701
        %v706 = vld [vmem:[%s600] sm:$0xff]
        %vm707 = vcmask 64512
        %708 = vst.msk [vmem:[#allocation3] sm:$0xff] %vm707, %v706
        %vm709 = vcmask 57344
        %710 = vst.msk [vmem:[#allocation4] sm:$0x1] %vm709, 1.0
        %711 = vst [vmem:[#allocation5] sm:$0x1] 1.0
        %v712 = vld [vmem:[%s6] sm:$0xf]
        %v713 = vld [vmem:[%s6 + $0x4] sm:$0xf]
        %v714 = vld [vmem:[%s6 + $0x8] sm:$0xf]
        %v715 = vld [vmem:[%s6 + $0xc] sm:$0xf]
        %v716 = vld [vmem:[%s6 + $0x10] sm:$0xf]
        %v717 = vld [vmem:[%s6 + $0x14] sm:$0xf]
        %v718 = vld [vmem:[%s6 + $0x18] sm:$0xf]
        %v719 = vld [vmem:[%s6 + $0x1c] sm:$0xf]
        %v720 = vld [vmem:[%s6 + $0x20] sm:$0xf]
        %v721 = vld [vmem:[%s6 + $0x24] sm:$0xf]
        %v722 = vld [vmem:[%s6 + $0x28] sm:$0xf]
        %v723 = vld [vmem:[%s6 + $0x2c] sm:$0xf]
        %v724 = vld [vmem:[%s6 + $0x30] sm:$0xf]
        %v725 = vld [vmem:[%s6 + $0x34] sm:$0xf]
        %v726 = vld [vmem:[%s6 + $0x38] sm:$0xf]
        %v727 = vld [vmem:[%s6 + $0x3c] sm:$0xf]
        %vm728 = vcmask 125952
        %729 = vst.msk [vmem:[#allocation7] sm:$0xf] %vm728, %v712
        %730 = vst.msk [vmem:[#allocation7 + $0x4] sm:$0xf] %vm728, %v713
        %731 = vst.msk [vmem:[#allocation7 + $0x8] sm:$0xf] %vm728, %v714
        %732 = vst.msk [vmem:[#allocation7 + $0xc] sm:$0xf] %vm728, %v715
        %733 = vst.msk [vmem:[#allocation7 + $0x10] sm:$0xf] %vm728, %v716
        %734 = vst.msk [vmem:[#allocation7 + $0x14] sm:$0xf] %vm728, %v717
        %735 = vst.msk [vmem:[#allocation7 + $0x18] sm:$0xf] %vm728, %v718
        %736 = vst.msk [vmem:[#allocation7 + $0x1c] sm:$0xf] %vm728, %v719
        %737 = vst.msk [vmem:[#allocation7 + $0x20] sm:$0xf] %vm728, %v720
        %738 = vst.msk [vmem:[#allocation7 + $0x24] sm:$0xf] %vm728, %v721
        %739 = vst.msk [vmem:[#allocation7 + $0x28] sm:$0xf] %vm728, %v722
        %740 = vst.msk [vmem:[#allocation7 + $0x2c] sm:$0xf] %vm728, %v723
        %741 = vst.msk [vmem:[#allocation7 + $0x30] sm:$0xf] %vm728, %v724
        %742 = vst.msk [vmem:[#allocation7 + $0x34] sm:$0xf] %vm728, %v725
        %743 = vst.msk [vmem:[#allocation7 + $0x38] sm:$0xf] %vm728, %v726
        %744 = vst.msk [vmem:[#allocation7 + $0x3c] sm:$0xf] %vm728, %v727
        %v745 = vlaneseq
        %v746 = vand.u32 %v745, 127
        %v747 = vcvt.s32.f32 %v746
        %v748 = vlaneseq
        %v749 = vshrl.u32 %v748, 7
        %v750 = vcvt.s32.f32 %v749
        %v751 = vld [vmem:[%s5] sm:$0x1]
        loop: start=0, step=1, limit=7
        $region81: #{graph_destructor_forward.1} parent=79 // loop_pre_header
          _
        $region82: #{graph_destructor_forward.1} parent=79 // loop_header
          %s753 = sphi 0, %s757
          %p754 = scmp.ge.s32.totalorder %s753, 7
          %v758 = vphi 0.0, %v1542
          %v759 = vphi 0.0, %v1537
        $region83: #{graph_destructor_forward.1} parent=79 // loop_header_branch
          %756 = sbr.rel (%p754) target = $region87
        $region84: #{graph_destructor_forward.1} parent=79 // loop_body
          %v760 = vld [vmem:[#allocation3] sm:$0xff]
          %v761 = vld [vmem:[#allocation4] sm:$0x1]
          %v762 = vld [vmem:[#allocation5] sm:$0x1]
          %v763 = vsel %vm707, %v760, 0.0
          %764 = vadd.xlane.f32.xlu0 %v763
          %v765 = vpop.xlane.xlu0 %764
          %v766 = vrot.slane %v765, 4
          %v767 = vadd.f32 %v765, %v766
          %v768 = vrot.slane %v767, 2
          %v769 = vadd.f32 %v767, %v768
          %v770 = vrot.slane %v769, 1
          %v771 = vadd.f32 %v769, %v770
          %vm772 = vcmp.gt.f32.partialorder %v771, 0.0
          %v773 = vpack.c.bf16 %v760, %v760
          %vm774 = vcmask 60416
          %775 = vst.msk [vmem:[#allocation6 + $0x4] sm:$0xf] %vm774, %v773
          %v776 = vld [vmem:[#allocation2] sm:$0xff]
          %v777 = vpack.c.bf16 %v776, %v776
          %v778 = vld [vmem:[%s8] sm:$0xf]
          %v779 = vld [vmem:[%s8 + $0x4] sm:$0xf]
          %v780 = vld [vmem:[%s8 + $0x8] sm:$0xf]
          %v781 = vld [vmem:[%s8 + $0xc] sm:$0xf]
          %v786 = vunpack.c.l.b16 %v778
          %v787 = vunpack.c.l.b16 %v779
          %v788 = vunpack.c.l.b16 %v780
          %v789 = vunpack.c.l.b16 %v781
          %v790 = vpack.c.b16 %v787, %v786
          %v791 = vpack.c.b16 %v789, %v788
          %v795 = vsel %vm704, %v777, 0
          %797 = vmatprep.subr.bf16.mxu0 0
          %798 = vmatpush1.bf16.msra.mxu0 %v790
          %799 = vmatprep.subr.bf16.mxu0 0
          %800 = vmatpush1.bf16.msra.mxu0 %v791
          %801 = vmatprep.subr.bf16.mxu0 0
          %802 = vmatpush1.bf16.msra.mxu0 0
          %803 = vmatprep.subr.bf16.mxu0 0
          %804 = vmatpush1.bf16.msra.mxu0 0
          %805 = vmatprep.subr.bf16.mxu0 0
          %806 = vmatpush1.bf16.msra.mxu0 0
          %807 = vmatprep.subr.bf16.mxu0 0
          %808 = vmatpush1.bf16.msra.mxu0 0
          %809 = vmatprep.subr.bf16.mxu0 0
          %810 = vmatpush1.bf16.msra.mxu0 0
          %811 = vmatprep.subr.bf16.mxu0 0
          %812 = vmatpush1.bf16.msra.mxu0 0
          %813 = vmatprep.subr.bf16.mxu0 0
          %814 = vmatpush1.bf16.msra.mxu0 0
          %815 = vmatprep.subr.bf16.mxu0 0
          %816 = vmatpush1.bf16.msra.mxu0 0
          %817 = vmatprep.subr.bf16.mxu0 0
          %818 = vmatpush1.bf16.msra.mxu0 0
          %819 = vmatprep.subr.bf16.mxu0 0
          %820 = vmatpush1.bf16.msra.mxu0 0
          %821 = vmatprep.subr.bf16.mxu0 0
          %822 = vmatpush1.bf16.msra.mxu0 0
          %823 = vmatprep.subr.bf16.mxu0 0
          %824 = vmatpush1.bf16.msra.mxu0 0
          %825 = vmatprep.subr.bf16.mxu0 0
          %826 = vmatpush1.bf16.msra.mxu0 0
          %827 = vmatprep.subr.bf16.mxu0 0
          %828 = vmatpush1.bf16.msra.mxu0 0
          %829 = vmatprep.mubr.bf16.mxu0 0
          %830 = vmatmul.mubr.bf16.gmra.mrb[0].mxu0 %v795
          %v831 = vpop.f32.mrb[0].mxu0
          %v832 = vadd.f32 0.0, %v831
          %v833 = vpop.f32.mrb[0].mxu0
          %v834 = vpop.f32.mrb[0].mxu0
          %v835 = vpop.f32.mrb[0].mxu0
          %836 = vdwg.mxu0
          %v837 = vld [vmem:[%s12] sm:$0x1]
          %v839 = vlaneseq
          %v840 = vshrl.u32 %v839, 7
          %v841 = vsub.s32 0, %v840
          %v842 = vrot.slane %v837, %v841
          %843 = vrot.lane.b32.xlu0 %v842, 32
          %v844 = vpop.permute.xlu0 %843
          %v846 = vadd.f32 %v832, %v844
          %v847 = vpack.c.bf16 %v832, %v832
          %848 = vst.msk [vmem:[#allocation7 + $0x40] sm:$0xf] %vm728, %v847
          %v849 = vld [vmem:[%s609] sm:$0xf]
          %v850 = vunpack.c.l.bf16 %v849
          %v852 = vlaneseq
          %v853 = vshrl.u32 %v852, 7
          %v854 = vsub.s32 0, %v853
          %v855 = vrot.slane %v762, %v854
          %v857 = vmul.f32 %v850, %v855
          %v858 = vpack.c.bf16 %v857, %v857
          %859 = vst [vmem:[#allocation6] sm:$0xf] %v858
          %v860 = vld [vmem:[#allocation6] sm:$0xff]
          %v861 = vld [vmem:[#allocation7] sm:$0xf]
          %v862 = vld [vmem:[#allocation7 + $0x4] sm:$0xf]
          %v863 = vld [vmem:[#allocation7 + $0x8] sm:$0xf]
          %v864 = vld [vmem:[#allocation7 + $0xc] sm:$0xf]
          %v865 = vld [vmem:[#allocation7 + $0x10] sm:$0xf]
          %v866 = vld [vmem:[#allocation7 + $0x14] sm:$0xf]
          %v867 = vld [vmem:[#allocation7 + $0x18] sm:$0xf]
          %v868 = vld [vmem:[#allocation7 + $0x1c] sm:$0xf]
          %v869 = vld [vmem:[#allocation7 + $0x20] sm:$0xf]
          %v870 = vld [vmem:[#allocation7 + $0x24] sm:$0xf]
          %v871 = vld [vmem:[#allocation7 + $0x28] sm:$0xf]
          %v872 = vld [vmem:[#allocation7 + $0x2c] sm:$0xf]
          %v873 = vld [vmem:[#allocation7 + $0x30] sm:$0xf]
          %v874 = vld [vmem:[#allocation7 + $0x34] sm:$0xf]
          %v875 = vld [vmem:[#allocation7 + $0x38] sm:$0xf]
          %v876 = vld [vmem:[#allocation7 + $0x3c] sm:$0xf]
          %v877 = vld [vmem:[#allocation7 + $0x40] sm:$0xf]
          %v878 = vld [vmem:[%s9] sm:$0x1]
          %v880 = vlaneseq
          %v881 = vshrl.u32 %v880, 7
          %v882 = vsub.s32 0, %v881
          %v883 = vrot.slane %v878, %v882
          %884 = vrot.lane.b32.xlu0 %v883, 16
          %v885 = vpop.permute.xlu0 %884
          %v887 = vadd.f32 %v832, %v885
          %v888 = vmul.f32 %v765, %v887
          %v890 = vunpack.c.l.b16 %v860
          %v891 = vunpack.c.h.b16 %v860
          %v892 = vpack.c.b16 %v890, %v890
          %v893 = vpack.c.b16 %v891, %v891
          %v912 = vunpack.c.l.b16 %v861
          %v913 = vunpack.c.l.b16 %v862
          %v914 = vunpack.c.l.b16 %v863
          %v915 = vunpack.c.l.b16 %v864
          %v916 = vunpack.c.l.b16 %v865
          %v917 = vunpack.c.l.b16 %v866
          %v918 = vunpack.c.l.b16 %v867
          %v919 = vunpack.c.l.b16 %v868
          %v920 = vunpack.c.l.b16 %v869
          %v921 = vunpack.c.l.b16 %v870
          %v922 = vunpack.c.l.b16 %v871
          %v923 = vunpack.c.l.b16 %v872
          %v924 = vunpack.c.l.b16 %v873
          %v925 = vunpack.c.l.b16 %v874
          %v926 = vunpack.c.l.b16 %v875
          %v927 = vunpack.c.l.b16 %v876
          %v928 = vunpack.c.l.b16 %v877
          %v929 = vpack.c.b16 %v913, %v912
          %v930 = vpack.c.b16 %v915, %v914
          %v931 = vpack.c.b16 %v917, %v916
          %v932 = vpack.c.b16 %v919, %v918
          %v933 = vpack.c.b16 %v921, %v920
          %v934 = vpack.c.b16 %v923, %v922
          %v935 = vpack.c.b16 %v925, %v924
          %v936 = vpack.c.b16 %v927, %v926
          %v937 = vpack.c.b16 %v928, %v928
          %947 = vrot.lane.b32.xlu0 %v888, 112
          %v948 = vpop.permute.xlu0 %947
          %v951 = vsel %vm707, %v893, 0
          %vm953 = vcmask 1043456
          %v955 = vsel %vm953, %v937, 0
          %957 = vmatprep.subr.bf16.mxu0 0
          %958 = vmatpush1.bf16.msra.mxu0 %v929
          %959 = vmatprep.subr.bf16.mxu0 0
          %960 = vmatpush1.bf16.msra.mxu0 %v930
          %961 = vmatprep.subr.bf16.mxu0 0
          %962 = vmatpush1.bf16.msra.mxu0 %v931
          %963 = vmatprep.subr.bf16.mxu0 0
          %964 = vmatpush1.bf16.msra.mxu0 %v932
          %965 = vmatprep.subr.bf16.mxu0 0
          %966 = vmatpush1.bf16.msra.mxu0 %v933
          %967 = vmatprep.subr.bf16.mxu0 0
          %968 = vmatpush1.bf16.msra.mxu0 %v934
          %969 = vmatprep.subr.bf16.mxu0 0
          %970 = vmatpush1.bf16.msra.mxu0 %v935
          %971 = vmatprep.subr.bf16.mxu0 0
          %972 = vmatpush1.bf16.msra.mxu0 %v936
          %973 = vmatprep.subr.bf16.mxu0 0
          %974 = vmatpush1.bf16.msra.mxu0 %v955
          %975 = vmatprep.subr.bf16.mxu0 0
          %976 = vmatpush1.bf16.msra.mxu0 0
          %977 = vmatprep.subr.bf16.mxu0 0
          %978 = vmatpush1.bf16.msra.mxu0 0
          %979 = vmatprep.subr.bf16.mxu0 0
          %980 = vmatpush1.bf16.msra.mxu0 0
          %981 = vmatprep.subr.bf16.mxu0 0
          %982 = vmatpush1.bf16.msra.mxu0 0
          %983 = vmatprep.subr.bf16.mxu0 0
          %984 = vmatpush1.bf16.msra.mxu0 0
          %985 = vmatprep.subr.bf16.mxu0 0
          %986 = vmatpush1.bf16.msra.mxu0 0
          %987 = vmatprep.subr.bf16.mxu0 0
          %988 = vmatpush1.bf16.msra.mxu0 0
          %989 = vmatprep.mubr.bf16.mxu0 %v951
          %990 = vmatmul.mubr.bf16.gmra.mrb[0].mxu0 %v892
          %v991 = vpop.f32.mrb[0].mxu0
          %v992 = vadd.f32 %v948, %v991
          %v993 = vpop.f32.mrb[0].mxu0
          %v994 = vpop.f32.mrb[0].mxu0
          %v995 = vpop.f32.mrb[0].mxu0
          %996 = vdwg.mxu0
          %v997 = vpack.c.bf16 %v992, %v992
          %v998 = vld [vmem:[%s10] sm:$0xf]
          %v999 = vld [vmem:[%s10 + $0x4] sm:$0xf]
          %v1000 = vld [vmem:[%s11] sm:$0x1]
          %v1002 = vlaneseq
          %v1003 = vshrl.u32 %v1002, 7
          %v1004 = vsub.s32 0, %v1003
          %v1005 = vrot.slane %v1000, %v1004
          %v1009 = vunpack.c.l.b16 %v998
          %v1010 = vunpack.c.l.b16 %v999
          %v1011 = vpack.c.b16 %v1010, %v1009
          %vm1013 = vcmask 130048
          %v1015 = vsel %vm1013, %v997, 0
          %1017 = vmatprep.subr.bf16.mxu0 0
          %1018 = vmatpush1.bf16.msra.mxu0 %v1011
          %1019 = vmatprep.subr.bf16.mxu0 0
          %1020 = vmatpush1.bf16.msra.mxu0 0
          %1021 = vmatprep.subr.bf16.mxu0 0
          %1022 = vmatpush1.bf16.msra.mxu0 0
          %1023 = vmatprep.subr.bf16.mxu0 0
          %1024 = vmatpush1.bf16.msra.mxu0 0
          %1025 = vmatprep.subr.bf16.mxu0 0
          %1026 = vmatpush1.bf16.msra.mxu0 0
          %1027 = vmatprep.subr.bf16.mxu0 0
          %1028 = vmatpush1.bf16.msra.mxu0 0
          %1029 = vmatprep.subr.bf16.mxu0 0
          %1030 = vmatpush1.bf16.msra.mxu0 0
          %1031 = vmatprep.subr.bf16.mxu0 0
          %1032 = vmatpush1.bf16.msra.mxu0 0
          %1033 = vmatprep.subr.bf16.mxu0 0
          %1034 = vmatpush1.bf16.msra.mxu0 0
          %1035 = vmatprep.subr.bf16.mxu0 0
          %1036 = vmatpush1.bf16.msra.mxu0 0
          %1037 = vmatprep.subr.bf16.mxu0 0
          %1038 = vmatpush1.bf16.msra.mxu0 0
          %1039 = vmatprep.subr.bf16.mxu0 0
          %1040 = vmatpush1.bf16.msra.mxu0 0
          %1041 = vmatprep.subr.bf16.mxu0 0
          %1042 = vmatpush1.bf16.msra.mxu0 0
          %1043 = vmatprep.subr.bf16.mxu0 0
          %1044 = vmatpush1.bf16.msra.mxu0 0
          %1045 = vmatprep.subr.bf16.mxu0 0
          %1046 = vmatpush1.bf16.msra.mxu0 0
          %1047 = vmatprep.subr.bf16.mxu0 0
          %1048 = vmatpush1.bf16.msra.mxu0 0
          %1049 = vmatprep.mubr.bf16.mxu0 0
          %1050 = vmatmul.mubr.bf16.gmra.mrb[0].mxu0 %v1015
          %v1051 = vpop.f32.mrb[0].mxu0
          %v1052 = vadd.f32 %v1005, %v1051
          %v1053 = vpop.f32.mrb[0].mxu0
          %v1054 = vpop.f32.mrb[0].mxu0
          %v1055 = vpop.f32.mrb[0].mxu0
          %1056 = vdwg.mxu0
          %1058 = vrot.lane.b32.xlu0 %v846, 96
          %v1059 = vpop.permute.xlu0 %1058
          %v1061 = vadd.f32 %v1052, %v1059
          %v1062 = vxor.u32 %v1061, 2147483648
          %v1063 = vmul.f32 %v1062, 1.442695
          %v1064 = vpow.pop %v1063
          %v1065 = vadd.f32 %v1064, 1.0
          %v1066 = vrcp.pop %v1065
          %v1067 = vmul.f32 1.0, %v1066
          %1068 = vrot.lane.b32.xlu0 %v846, 32
          %v1069 = vpop.permute.xlu0 %1068
          %v1071 = vmul.f32 %v1067, %v1069
          %1073 = vrot.lane.b32.xlu0 %v1071, 64
          %v1074 = vpop.permute.xlu0 %1073
          %v1076 = vadd.f32 %v1052, %v1074
          %v1077 = vtanh.pop %v1076
          %v1078 = vsub.f32 1.0, %v1067
          %1080 = vrot.lane.b32.xlu0 %v1077, 96
          %v1081 = vpop.permute.xlu0 %1080
          %v1083 = vmul.f32 %v1078, %v1081
          %1085 = vrot.lane.b32.xlu0 %v776, 32
          %v1086 = vpop.permute.xlu0 %1085
          %v1088 = vmul.f32 %v1067, %v1086
          %v1089 = vadd.f32 %v1083, %v1088
          %v1090 = vsel %vm772, 1, 0
          %vm1091 = vcmp.eq.s32.totalorder %v1090, 1
          %v1092 = vsel %vm1091, %v1089, %v1086
          %1094 = vrot.lane.b32.xlu0 %v1092, 96
          %v1095 = vpop.permute.xlu0 %1094
          %1097 = vst.msk [vmem:[#allocation2] sm:$0xff] %vm704, %v1095
          %v1098 = vld [vmem:[#allocation2] sm:$0xff]
          %v1099 = vpack.c.bf16 %v1098, %v1098
          %s1100 = scalar_lea.vmem %s8, 16
          %v1101 = vld [vmem:[%s1100] sm:$0xf]
          %v1102 = vld [vmem:[%s1100 + $0x4] sm:$0xf]
          %v1103 = vld [vmem:[%s1100 + $0x8] sm:$0xf]
          %v1104 = vld [vmem:[%s1100 + $0xc] sm:$0xf]
          %v1109 = vunpack.c.l.b16 %v1101
          %v1110 = vunpack.c.l.b16 %v1102
          %v1111 = vunpack.c.l.b16 %v1103
          %v1112 = vunpack.c.l.b16 %v1104
          %v1113 = vpack.c.b16 %v1110, %v1109
          %v1114 = vpack.c.b16 %v1112, %v1111
          %v1118 = vsel %vm704, %v1099, 0
          %1120 = vmatprep.subr.bf16.mxu0 0
          %1121 = vmatpush1.bf16.msra.mxu0 %v1113
          %1122 = vmatprep.subr.bf16.mxu0 0
          %1123 = vmatpush1.bf16.msra.mxu0 %v1114
          %1124 = vmatprep.subr.bf16.mxu0 0
          %1125 = vmatpush1.bf16.msra.mxu0 0
          %1126 = vmatprep.subr.bf16.mxu0 0
          %1127 = vmatpush1.bf16.msra.mxu0 0
          %1128 = vmatprep.subr.bf16.mxu0 0
          %1129 = vmatpush1.bf16.msra.mxu0 0
          %1130 = vmatprep.subr.bf16.mxu0 0
          %1131 = vmatpush1.bf16.msra.mxu0 0
          %1132 = vmatprep.subr.bf16.mxu0 0
          %1133 = vmatpush1.bf16.msra.mxu0 0
          %1134 = vmatprep.subr.bf16.mxu0 0
          %1135 = vmatpush1.bf16.msra.mxu0 0
          %1136 = vmatprep.subr.bf16.mxu0 0
          %1137 = vmatpush1.bf16.msra.mxu0 0
          %1138 = vmatprep.subr.bf16.mxu0 0
          %1139 = vmatpush1.bf16.msra.mxu0 0
          %1140 = vmatprep.subr.bf16.mxu0 0
          %1141 = vmatpush1.bf16.msra.mxu0 0
          %1142 = vmatprep.subr.bf16.mxu0 0
          %1143 = vmatpush1.bf16.msra.mxu0 0
          %1144 = vmatprep.subr.bf16.mxu0 0
          %1145 = vmatpush1.bf16.msra.mxu0 0
          %1146 = vmatprep.subr.bf16.mxu0 0
          %1147 = vmatpush1.bf16.msra.mxu0 0
          %1148 = vmatprep.subr.bf16.mxu0 0
          %1149 = vmatpush1.bf16.msra.mxu0 0
          %1150 = vmatprep.subr.bf16.mxu0 0
          %1151 = vmatpush1.bf16.msra.mxu0 0
          %1152 = vmatprep.mubr.bf16.mxu0 0
          %1153 = vmatmul.mubr.bf16.gmra.mrb[0].mxu0 %v1118
          %v1154 = vpop.f32.mrb[0].mxu0
          %v1155 = vadd.f32 0.0, %v1154
          %v1156 = vpop.f32.mrb[0].mxu0
          %v1157 = vpop.f32.mrb[0].mxu0
          %v1158 = vpop.f32.mrb[0].mxu0
          %1159 = vdwg.mxu0
          %s1160 = scalar_lea.vmem %s12, 1
          %v1161 = vld [vmem:[%s1160] sm:$0x1]
          %v1163 = vlaneseq
          %v1164 = vshrl.u32 %v1163, 7
          %v1165 = vsub.s32 0, %v1164
          %v1166 = vrot.slane %v1161, %v1165
          %1167 = vrot.lane.b32.xlu0 %v1166, 32
          %v1168 = vpop.permute.xlu0 %1167
          %v1170 = vadd.f32 %v1155, %v1168
          %v1171 = vpack.c.bf16 %v1155, %v1155
          %1172 = vst.msk [vmem:[#allocation7 + $0x40] sm:$0xf] %vm728, %v1171
          %s1173 = scalar_lea.vmem %s609, 4
          %v1174 = vld [vmem:[%s1173] sm:$0xf]
          %v1175 = vunpack.c.l.bf16 %v1174
          %v1176 = vmul.f32 %v1175, %v855
          %v1177 = vpack.c.bf16 %v1176, %v1176
          %1178 = vst [vmem:[#allocation6] sm:$0xf] %v1177
          %v1179 = vld [vmem:[#allocation6] sm:$0xff]
          %v1180 = vld [vmem:[#allocation7] sm:$0xf]
          %v1181 = vld [vmem:[#allocation7 + $0x4] sm:$0xf]
          %v1182 = vld [vmem:[#allocation7 + $0x8] sm:$0xf]
          %v1183 = vld [vmem:[#allocation7 + $0xc] sm:$0xf]
          %v1184 = vld [vmem:[#allocation7 + $0x10] sm:$0xf]
          %v1185 = vld [vmem:[#allocation7 + $0x14] sm:$0xf]
          %v1186 = vld [vmem:[#allocation7 + $0x18] sm:$0xf]
          %v1187 = vld [vmem:[#allocation7 + $0x1c] sm:$0xf]
          %v1188 = vld [vmem:[#allocation7 + $0x20] sm:$0xf]
          %v1189 = vld [vmem:[#allocation7 + $0x24] sm:$0xf]
          %v1190 = vld [vmem:[#allocation7 + $0x28] sm:$0xf]
          %v1191 = vld [vmem:[#allocation7 + $0x2c] sm:$0xf]
          %v1192 = vld [vmem:[#allocation7 + $0x30] sm:$0xf]
          %v1193 = vld [vmem:[#allocation7 + $0x34] sm:$0xf]
          %v1194 = vld [vmem:[#allocation7 + $0x38] sm:$0xf]
          %v1195 = vld [vmem:[#allocation7 + $0x3c] sm:$0xf]
          %v1196 = vld [vmem:[#allocation7 + $0x40] sm:$0xf]
          %s1197 = scalar_lea.vmem %s9, 1
          %v1198 = vld [vmem:[%s1197] sm:$0x1]
          %v1200 = vlaneseq
          %v1201 = vshrl.u32 %v1200, 7
          %v1202 = vsub.s32 0, %v1201
          %v1203 = vrot.slane %v1198, %v1202
          %1204 = vrot.lane.b32.xlu0 %v1203, 16
          %v1205 = vpop.permute.xlu0 %1204
          %v1207 = vadd.f32 %v1155, %v1205
          %v1208 = vmul.f32 %v765, %v1207
          %v1210 = vunpack.c.l.b16 %v1179
          %v1211 = vunpack.c.h.b16 %v1179
          %v1212 = vpack.c.b16 %v1210, %v1210
          %v1213 = vpack.c.b16 %v1211, %v1211
          %v1232 = vunpack.c.l.b16 %v1180
          %v1233 = vunpack.c.l.b16 %v1181
          %v1234 = vunpack.c.l.b16 %v1182
          %v1235 = vunpack.c.l.b16 %v1183
          %v1236 = vunpack.c.l.b16 %v1184
          %v1237 = vunpack.c.l.b16 %v1185
          %v1238 = vunpack.c.l.b16 %v1186
          %v1239 = vunpack.c.l.b16 %v1187
          %v1240 = vunpack.c.l.b16 %v1188
          %v1241 = vunpack.c.l.b16 %v1189
          %v1242 = vunpack.c.l.b16 %v1190
          %v1243 = vunpack.c.l.b16 %v1191
          %v1244 = vunpack.c.l.b16 %v1192
          %v1245 = vunpack.c.l.b16 %v1193
          %v1246 = vunpack.c.l.b16 %v1194
          %v1247 = vunpack.c.l.b16 %v1195
          %v1248 = vunpack.c.l.b16 %v1196
          %v1249 = vpack.c.b16 %v1233, %v1232
          %v1250 = vpack.c.b16 %v1235, %v1234
          %v1251 = vpack.c.b16 %v1237, %v1236
          %v1252 = vpack.c.b16 %v1239, %v1238
          %v1253 = vpack.c.b16 %v1241, %v1240
          %v1254 = vpack.c.b16 %v1243, %v1242
          %v1255 = vpack.c.b16 %v1245, %v1244
          %v1256 = vpack.c.b16 %v1247, %v1246
          %v1257 = vpack.c.b16 %v1248, %v1248
          %1267 = vrot.lane.b32.xlu0 %v1208, 112
          %v1268 = vpop.permute.xlu0 %1267
          %v1271 = vsel %vm707, %v1213, 0
          %v1274 = vsel %vm953, %v1257, 0
          %1276 = vmatprep.subr.bf16.mxu0 0
          %1277 = vmatpush1.bf16.msra.mxu0 %v1249
          %1278 = vmatprep.subr.bf16.mxu0 0
          %1279 = vmatpush1.bf16.msra.mxu0 %v1250
          %1280 = vmatprep.subr.bf16.mxu0 0
          %1281 = vmatpush1.bf16.msra.mxu0 %v1251
          %1282 = vmatprep.subr.bf16.mxu0 0
          %1283 = vmatpush1.bf16.msra.mxu0 %v1252
          %1284 = vmatprep.subr.bf16.mxu0 0
          %1285 = vmatpush1.bf16.msra.mxu0 %v1253
          %1286 = vmatprep.subr.bf16.mxu0 0
          %1287 = vmatpush1.bf16.msra.mxu0 %v1254
          %1288 = vmatprep.subr.bf16.mxu0 0
          %1289 = vmatpush1.bf16.msra.mxu0 %v1255
          %1290 = vmatprep.subr.bf16.mxu0 0
          %1291 = vmatpush1.bf16.msra.mxu0 %v1256
          %1292 = vmatprep.subr.bf16.mxu0 0
          %1293 = vmatpush1.bf16.msra.mxu0 %v1274
          %1294 = vmatprep.subr.bf16.mxu0 0
          %1295 = vmatpush1.bf16.msra.mxu0 0
          %1296 = vmatprep.subr.bf16.mxu0 0
          %1297 = vmatpush1.bf16.msra.mxu0 0
          %1298 = vmatprep.subr.bf16.mxu0 0
          %1299 = vmatpush1.bf16.msra.mxu0 0
          %1300 = vmatprep.subr.bf16.mxu0 0
          %1301 = vmatpush1.bf16.msra.mxu0 0
          %1302 = vmatprep.subr.bf16.mxu0 0
          %1303 = vmatpush1.bf16.msra.mxu0 0
          %1304 = vmatprep.subr.bf16.mxu0 0
          %1305 = vmatpush1.bf16.msra.mxu0 0
          %1306 = vmatprep.subr.bf16.mxu0 0
          %1307 = vmatpush1.bf16.msra.mxu0 0
          %1308 = vmatprep.mubr.bf16.mxu0 %v1271
          %1309 = vmatmul.mubr.bf16.gmra.mrb[0].mxu0 %v1212
          %v1310 = vpop.f32.mrb[0].mxu0
          %v1311 = vadd.f32 %v1268, %v1310
          %v1312 = vpop.f32.mrb[0].mxu0
          %v1313 = vpop.f32.mrb[0].mxu0
          %v1314 = vpop.f32.mrb[0].mxu0
          %1315 = vdwg.mxu0
          %v1316 = vpack.c.bf16 %v1311, %v1311
          %s1317 = scalar_lea.vmem %s10, 8
          %v1318 = vld [vmem:[%s1317] sm:$0xf]
          %v1319 = vld [vmem:[%s1317 + $0x4] sm:$0xf]
          %s1320 = scalar_lea.vmem %s11, 1
          %v1321 = vld [vmem:[%s1320] sm:$0x1]
          %v1323 = vlaneseq
          %v1324 = vshrl.u32 %v1323, 7
          %v1325 = vsub.s32 0, %v1324
          %v1326 = vrot.slane %v1321, %v1325
          %v1330 = vunpack.c.l.b16 %v1318
          %v1331 = vunpack.c.l.b16 %v1319
          %v1332 = vpack.c.b16 %v1331, %v1330
          %v1335 = vsel %vm1013, %v1316, 0
          %1337 = vmatprep.subr.bf16.mxu0 0
          %1338 = vmatpush1.bf16.msra.mxu0 %v1332
          %1339 = vmatprep.subr.bf16.mxu0 0
          %1340 = vmatpush1.bf16.msra.mxu0 0
          %1341 = vmatprep.subr.bf16.mxu0 0
          %1342 = vmatpush1.bf16.msra.mxu0 0
          %1343 = vmatprep.subr.bf16.mxu0 0
          %1344 = vmatpush1.bf16.msra.mxu0 0
          %1345 = vmatprep.subr.bf16.mxu0 0
          %1346 = vmatpush1.bf16.msra.mxu0 0
          %1347 = vmatprep.subr.bf16.mxu0 0
          %1348 = vmatpush1.bf16.msra.mxu0 0
          %1349 = vmatprep.subr.bf16.mxu0 0
          %1350 = vmatpush1.bf16.msra.mxu0 0
          %1351 = vmatprep.subr.bf16.mxu0 0
          %1352 = vmatpush1.bf16.msra.mxu0 0
          %1353 = vmatprep.subr.bf16.mxu0 0
          %1354 = vmatpush1.bf16.msra.mxu0 0
          %1355 = vmatprep.subr.bf16.mxu0 0
          %1356 = vmatpush1.bf16.msra.mxu0 0
          %1357 = vmatprep.subr.bf16.mxu0 0
          %1358 = vmatpush1.bf16.msra.mxu0 0
          %1359 = vmatprep.subr.bf16.mxu0 0
          %1360 = vmatpush1.bf16.msra.mxu0 0
          %1361 = vmatprep.subr.bf16.mxu0 0
          %1362 = vmatpush1.bf16.msra.mxu0 0
          %1363 = vmatprep.subr.bf16.mxu0 0
          %1364 = vmatpush1.bf16.msra.mxu0 0
          %1365 = vmatprep.subr.bf16.mxu0 0
          %1366 = vmatpush1.bf16.msra.mxu0 0
          %1367 = vmatprep.subr.bf16.mxu0 0
          %1368 = vmatpush1.bf16.msra.mxu0 0
          %1369 = vmatprep.mubr.bf16.mxu0 0
          %1370 = vmatmul.mubr.bf16.gmra.mrb[0].mxu0 %v1335
          %v1371 = vpop.f32.mrb[0].mxu0
          %v1372 = vadd.f32 %v1326, %v1371
          %v1373 = vpop.f32.mrb[0].mxu0
          %v1374 = vpop.f32.mrb[0].mxu0
          %v1375 = vpop.f32.mrb[0].mxu0
          %1376 = vdwg.mxu0
          %1378 = vrot.lane.b32.xlu0 %v1170, 96
          %v1379 = vpop.permute.xlu0 %1378
          %v1381 = vadd.f32 %v1372, %v1379
          %v1382 = vxor.u32 %v1381, 2147483648
          %v1383 = vmul.f32 %v1382, 1.442695
          %v1384 = vpow.pop %v1383
          %v1385 = vadd.f32 %v1384, 1.0
          %v1386 = vrcp.pop %v1385
          %v1387 = vmul.f32 1.0, %v1386
          %1388 = vrot.lane.b32.xlu0 %v1170, 32
          %v1389 = vpop.permute.xlu0 %1388
          %v1391 = vmul.f32 %v1387, %v1389
          %1393 = vrot.lane.b32.xlu0 %v1391, 64
          %v1394 = vpop.permute.xlu0 %1393
          %v1396 = vadd.f32 %v1372, %v1394
          %v1397 = vtanh.pop %v1396
          %v1398 = vsub.f32 1.0, %v1387
          %1400 = vrot.lane.b32.xlu0 %v1397, 96
          %v1401 = vpop.permute.xlu0 %1400
          %v1403 = vmul.f32 %v1398, %v1401
          %1405 = vrot.lane.b32.xlu0 %v1098, 32
          %v1406 = vpop.permute.xlu0 %1405
          %v1408 = vmul.f32 %v1387, %v1406
          %v1409 = vadd.f32 %v1403, %v1408
          %v1410 = vsel %vm1091, %v1409, %v1406
          %1412 = vrot.lane.b32.xlu0 %v1410, 96
          %v1413 = vpop.permute.xlu0 %1412
          %1415 = vst.msk [vmem:[#allocation2] sm:$0xff] %vm704, %v1413
          %v1416 = vld [vmem:[#allocation2] sm:$0xff]
          %v1417 = vld [vmem:[%s13] sm:$0x1]
          %v1418 = vld [vmem:[#allocation8] sm:$0x1]
          %1420 = vset.pattern.permute.xlu0 0
          %1421 = vperm.xlu0 %1420, %v1418
          %v1422 = vpop.permute.xlu0 %1421
          %v1424 = vlaneseq
          %v1425 = vshrl.u32 %v1424, 7
          %v1426 = vsub.s32 0, %v1425
          %v1427 = vrot.slane %v1422, %v1426
          %v1429 = vsel %vm704, %v1417, 0
          %v1432 = vsel %vm704, %v1416, 0
          %1434 = vmatprep.subr.mxu0 0.0
          %1435 = vmatpush1.xpose.msra.mxu0 %v1432
          %1436 = vmatprep.subr.mxu0 0.0
          %1437 = vmatpush1.xpose.msra.mxu0 0.0
          %1438 = vmatprep.subr.mxu0 0.0
          %1439 = vmatpush1.xpose.msra.mxu0 0.0
          %1440 = vmatprep.subr.mxu0 0.0
          %1441 = vmatpush1.xpose.msra.mxu0 0.0
          %1442 = vmatprep.subr.mxu0 0.0
          %1443 = vmatpush1.xpose.msra.mxu0 0.0
          %1444 = vmatprep.subr.mxu0 0.0
          %1445 = vmatpush1.xpose.msra.mxu0 0.0
          %1446 = vmatprep.subr.mxu0 0.0
          %1447 = vmatpush1.xpose.msra.mxu0 0.0
          %1448 = vmatprep.subr.mxu0 0.0
          %1449 = vmatpush1.xpose.msra.mxu0 0.0
          %1450 = vmatprep.subr.mxu0 0.0
          %1451 = vmatpush1.xpose.msra.mxu0 0.0
          %1452 = vmatprep.subr.mxu0 0.0
          %1453 = vmatpush1.xpose.msra.mxu0 0.0
          %1454 = vmatprep.subr.mxu0 0.0
          %1455 = vmatpush1.xpose.msra.mxu0 0.0
          %1456 = vmatprep.subr.mxu0 0.0
          %1457 = vmatpush1.xpose.msra.mxu0 0.0
          %1458 = vmatprep.subr.mxu0 0.0
          %1459 = vmatpush1.xpose.msra.mxu0 0.0
          %1460 = vmatprep.subr.mxu0 0.0
          %1461 = vmatpush1.xpose.msra.mxu0 0.0
          %1462 = vmatprep.subr.mxu0 0.0
          %1463 = vmatpush1.xpose.msra.mxu0 0.0
          %1464 = vmatprep.subr.mxu0 0.0
          %1465 = vmatpush1.xpose.msra.mxu0 0.0
          %1466 = vmatprep.subr.mxu0 0.0
          %1467 = vmatpush1.xpose.msra.mxu0 0.0
          %1468 = vmatprep.subr.mxu0 0.0
          %1469 = vmatpush1.xpose.msra.mxu0 0.0
          %1470 = vmatprep.subr.mxu0 0.0
          %1471 = vmatpush1.xpose.msra.mxu0 0.0
          %1472 = vmatprep.subr.mxu0 0.0
          %1473 = vmatpush1.xpose.msra.mxu0 0.0
          %1474 = vmatprep.subr.mxu0 0.0
          %1475 = vmatpush1.xpose.msra.mxu0 0.0
          %1476 = vmatprep.subr.mxu0 0.0
          %1477 = vmatpush1.xpose.msra.mxu0 0.0
          %1478 = vmatprep.subr.mxu0 0.0
          %1479 = vmatpush1.xpose.msra.mxu0 0.0
          %1480 = vmatprep.subr.mxu0 0.0
          %1481 = vmatpush1.xpose.msra.mxu0 0.0
          %1482 = vmatprep.subr.mxu0 0.0
          %1483 = vmatpush1.xpose.msra.mxu0 0.0
          %1484 = vmatprep.subr.mxu0 0.0
          %1485 = vmatpush1.xpose.msra.mxu0 0.0
          %1486 = vmatprep.subr.mxu0 0.0
          %1487 = vmatpush1.xpose.msra.mxu0 0.0
          %1488 = vmatprep.subr.mxu0 0.0
          %1489 = vmatpush1.xpose.msra.mxu0 0.0
          %1490 = vmatprep.subr.mxu0 0.0
          %1491 = vmatpush1.xpose.msra.mxu0 0.0
          %1492 = vmatprep.subr.mxu0 0.0
          %1493 = vmatpush1.xpose.msra.mxu0 0.0
          %1494 = vmatprep.subr.mxu0 0.0
          %1495 = vmatpush1.xpose.msra.mxu0 0.0
          %1496 = vmatprep.subr.mxu0 0.0
          %1497 = vmatpush1.xpose.msra.mxu0 0.0
          %1498 = vmatprep.mubr.f32.mxu0 0.0
          %1499 = vmatmul.mubr.f32.gmra.mrb[0].mxu0 %v1429
          %v1500 = vpop.f32.mrb[0].mxu0
          %v1501 = vadd.f32 %v1427, %v1500
          %v1502 = vpop.f32.mrb[0].mxu0
          %1503 = vdwg.mxu0
          %vm1504 = vcmp.gt.f32.partialorder %v761, 0.0
          %v1505 = vsel %vm1504, %v1501, -1e+30
          %s1506 = scalar_lea.vmem %s604, %s753
          %v1507 = vld [vmem:[%s1506] sm:$0x1]
          %v1508 = vadd.f32 %v1505, %v1507
          %v1509 = vsel %vm709, %v1508, -inf
          %1510 = vmax.xlane.f32.xlu0 %v1509
          %v1511 = vpop.xlane.xlu0 %1510
          %vm1512 = vcmp.ge.f32.partialorder %v1508, %v1511
          %v1513 = vsel %vm1512, %v747, 8.0
          %v1514 = vsel %vm709, %v1513, inf
          %1515 = vmin.xlane.f32.xlu0 %v1514
          %v1516 = vpop.xlane.xlu0 %1515
          %vm1517 = vcmp.eq.f32.partialorder %v747, %v1516
          %v1518 = vsel %vm1517, 1, 0
          %v1519 = vcvt.s32.f32 %v1518
          %v1520 = vsel %vm709, %v1505, -inf
          %1521 = vmax.xlane.f32.xlu0 %v1520
          %v1522 = vpop.xlane.xlu0 %1521
          %v1523 = vsub.f32 %v1505, %v1522
          %v1524 = vmul.f32 %v1523, 1.442695
          %v1525 = vpow.pop %v1524
          %v1526 = vsel %vm709, %v1525, 0.0
          %1527 = vadd.xlane.f32.xlu0 %v1526
          %v1528 = vpop.xlane.xlu0 %1527
          %v1529 = vlog2.pop %v1528
          %v1530 = vmul.f32 %v1529, 0.6931472
          %v1531 = vadd.f32 %v1522, %v1530
          %v1532 = vmul.f32 %v1505, %v1519
          %v1533 = vsel %vm709, %v1532, 0.0
          %1534 = vadd.xlane.f32.xlu0 %v1533
          %v1535 = vpop.xlane.xlu0 %1534
          %v1536 = vsub.f32 %v1535, %v1531
          %v1537 = vadd.f32 %v759, %v1536
          %s1538 = ssub.s32 7, %s753
          %v1539 = vstv %s1538
          %vm1540 = vcmp.eq.s32.totalorder %v746, %v1539
          %v1541 = vsel %vm1540, %v1516, 0.0
          %v1542 = vadd.f32 %v758, %v1541
          %v1543 = vsub.f32 1.0, %v1519
          %v1544 = vmul.f32 %v761, %v1543
          %1545 = vst.msk [vmem:[#allocation4] sm:$0x1] %vm709, %v1544
          %vm1546 = vcmp.ne.f32.partialorder %v751, %v1516
          %v1547 = vsel %vm1546, 1, 0
          %v1548 = vcvt.s32.f32 %v1547
          %v1549 = vmul.f32 %v762, %v1548
          %1550 = vst [vmem:[#allocation5] sm:$0x1] %v1549
          %v1551 = vlaneseq
          %v1552 = vshrl.u32 %v1551, 7
          %v1553 = vsub.s32 0, %v1552
          %v1554 = vrot.slane %v1516, %v1553
          %vm1555 = vcmp.ne.f32.partialorder %v750, %v1554
          %vm1556 = vcmp.ne.f32.partialorder %v747, %v1554
          %vm1557 = vmand %vm1555, %vm1556
          %v1558 = vsel %vm1557, 1, 0
          %v1559 = vcvt.s32.f32 %v1558
          %v1560 = vmul.f32 %v760, %v1559
          %1561 = vst.msk [vmem:[#allocation3] sm:$0xff] %vm707, %v1560
        $region85: #{graph_destructor_forward.1} parent=79 // loop_footer
          %s757 = sadd.s32 1, %s753
        $region86: #{graph_destructor_forward.1} parent=79 // loop_footer_branch
          %752 = sbr.rel target = $region82
        $region87: #{graph_destructor_forward.1} parent=79 // loop_exit
          _
        %v1562 = vld [vmem:[#allocation4] sm:$0x1]
        %v1563 = vmul.f32 %v747, %v1562
        %v1564 = vsel %vm709, %v1563, 0.0
        %1565 = vadd.xlane.f32.xlu0 %v1564
        %v1566 = vpop.xlane.xlu0 %1565
        %vm1567 = vcmp.eq.s32.totalorder %v746, 0
        %v1568 = vsel %vm1567, %v1566, 0.0
        %v1569 = vadd.f32 %v758, %v1568
        %1570 = vst.msk [vmem:[%s612] sm:$0x1] %vm709, %v1569
        %vm1571 = vcmask 0
        %1572 = vst.msk [vmem:[%s615] sm:$0x1] %vm1571, %v759
        %v1573 = vld [vmem:[#allocation2] sm:$0xff]
        %v1575 = vsel %vm707, %v1562, 0
        %1577 = vmatprep.subr.mxu0 0.0
        %1578 = vmatpush1.msra.mxu0 %v1573
        %1579 = vmatprep.subr.mxu0 0.0
        %1580 = vmatpush1.msra.mxu0 0.0
        %1581 = vmatprep.subr.mxu0 0.0
        %1582 = vmatpush1.msra.mxu0 0.0
        %1583 = vmatprep.subr.mxu0 0.0
        %1584 = vmatpush1.msra.mxu0 0.0
        %1585 = vmatprep.subr.mxu0 0.0
        %1586 = vmatpush1.msra.mxu0 0.0
        %1587 = vmatprep.subr.mxu0 0.0
        %1588 = vmatpush1.msra.mxu0 0.0
        %1589 = vmatprep.subr.mxu0 0.0
        %1590 = vmatpush1.msra.mxu0 0.0
        %1591 = vmatprep.subr.mxu0 0.0
        %1592 = vmatpush1.msra.mxu0 0.0
        %1593 = vmatprep.subr.mxu0 0.0
        %1594 = vmatpush1.msra.mxu0 0.0
        %1595 = vmatprep.subr.mxu0 0.0
        %1596 = vmatpush1.msra.mxu0 0.0
        %1597 = vmatprep.subr.mxu0 0.0
        %1598 = vmatpush1.msra.mxu0 0.0
        %1599 = vmatprep.subr.mxu0 0.0
        %1600 = vmatpush1.msra.mxu0 0.0
        %1601 = vmatprep.subr.mxu0 0.0
        %1602 = vmatpush1.msra.mxu0 0.0
        %1603 = vmatprep.subr.mxu0 0.0
        %1604 = vmatpush1.msra.mxu0 0.0
        %1605 = vmatprep.subr.mxu0 0.0
        %1606 = vmatpush1.msra.mxu0 0.0
        %1607 = vmatprep.subr.mxu0 0.0
        %1608 = vmatpush1.msra.mxu0 0.0
        %1609 = vmatprep.subr.mxu0 0.0
        %1610 = vmatpush1.msra.mxu0 0.0
        %1611 = vmatprep.subr.mxu0 0.0
        %1612 = vmatpush1.msra.mxu0 0.0
        %1613 = vmatprep.subr.mxu0 0.0
        %1614 = vmatpush1.msra.mxu0 0.0
        %1615 = vmatprep.subr.mxu0 0.0
        %1616 = vmatpush1.msra.mxu0 0.0
        %1617 = vmatprep.subr.mxu0 0.0
        %1618 = vmatpush1.msra.mxu0 0.0
        %1619 = vmatprep.subr.mxu0 0.0
        %1620 = vmatpush1.msra.mxu0 0.0
        %1621 = vmatprep.subr.mxu0 0.0
        %1622 = vmatpush1.msra.mxu0 0.0
        %1623 = vmatprep.subr.mxu0 0.0
        %1624 = vmatpush1.msra.mxu0 0.0
        %1625 = vmatprep.subr.mxu0 0.0
        %1626 = vmatpush1.msra.mxu0 0.0
        %1627 = vmatprep.subr.mxu0 0.0
        %1628 = vmatpush1.msra.mxu0 0.0
        %1629 = vmatprep.subr.mxu0 0.0
        %1630 = vmatpush1.msra.mxu0 0.0
        %1631 = vmatprep.subr.mxu0 0.0
        %1632 = vmatpush1.msra.mxu0 0.0
        %1633 = vmatprep.subr.mxu0 0.0
        %1634 = vmatpush1.msra.mxu0 0.0
        %1635 = vmatprep.subr.mxu0 0.0
        %1636 = vmatpush1.msra.mxu0 0.0
        %1637 = vmatprep.subr.mxu0 0.0
        %1638 = vmatpush1.msra.mxu0 0.0
        %1639 = vmatprep.subr.mxu0 0.0
        %1640 = vmatpush1.msra.mxu0 0.0
        %1641 = vmatprep.mubr.f32.mxu0 0.0
        %1642 = vmatmul.mubr.f32.gmra.mrb[0].mxu0 %v1575
        %v1643 = vpop.f32.mrb[0].mxu0
        %v1644 = vadd.f32 0.0, %v1643
        %v1645 = vpop.f32.mrb[0].mxu0
        %1646 = vdwg.mxu0
        %vm1647 = vcmask 253952
        %1648 = vst.msk [vmem:[%s582] sm:$0x1] %vm1647, %v1644
        %s1649 = sand.u32 %s377, 1
        %s1650 = scalar_lea.sflag [#allocation10], %s1649
        %s1651 = sand.u32 %s377, 1
        %s1652 = scalar_lea.vmem [#allocation9], %s1651
        %p1653 = scmp.lt.s32.totalorder %s34, 1
        %s1654 = scalar_select %p1653, %s34, 1
        %s1655 = scalar_lea.vmem %s16, %s1654
        %p1656 = scmp.lt.s32.totalorder %s34, 1
        %s1657 = scalar_select %p1656, %s34, 1
        %s1658 = scalar_lea.vmem %s17, %s1657
        // Predicated region
        $region88: #{graph_destructor_forward.1} parent=79 // pred_check
          %p1659 = pneg %p387
        $region89: #{graph_destructor_forward.1} parent=79 // pred_check_branch
          %1661 = sbr.rel (%p1659) target = $region91
        $region90: #{graph_destructor_forward.1} parent=79 // pred_region
          %s1663 = ssub.s32 16, 16
          %1664 = vsyncadd %s1650, %s1663
          %s1665 = smul.addr %s34, 16
          %s1666 = scalar_lea.hbm %s15, %s1665
          %s1668 = sshll.u32 %s1652, 4
          %s1669 = int_to_ptr.vmem [resolvable:$true] %s1668
          %1671 = dma.vmem_to_hbm [thread:$0]  %s1669, 16, %s1666, %s1650
        $region91: #{graph_destructor_forward.1} parent=79 // pred_fallthru
          _
        // Predicated region
        $region92: #{graph_destructor_forward.1} parent=79 // pred_check
          %p1672 = pneg %p413
        $region93: #{graph_destructor_forward.1} parent=79 // pred_check_branch
          %1674 = sbr.rel (%p1672) target = $region95
        $region94: #{graph_destructor_forward.1} parent=79 // pred_region
          _
        $region95: #{graph_destructor_forward.1} parent=79 // pred_fallthru
          _
        // Predicated region
        $region96: #{graph_destructor_forward.1} parent=79 // pred_check
          %p1675 = pneg %p439
        $region97: #{graph_destructor_forward.1} parent=79 // pred_check_branch
          %1677 = sbr.rel (%p1675) target = $region99
        $region98: #{graph_destructor_forward.1} parent=79 // pred_region
          _
        $region99: #{graph_destructor_forward.1} parent=79 // pred_fallthru
          _
      $region80: #{graph_destructor_forward.1} parent=5 // pred_fallthru
        _
      %p1678 = scmp.le.s32.totalorder 2, %s29
      // Predicated region
      $region100: #{graph_destructor_forward.1} parent=5 // pred_check
        %p1679 = pneg %p1678
      $region101: #{graph_destructor_forward.1} parent=5 // pred_check_branch
        %1681 = sbr.rel (%p1679) target = $region103
      $region102: #{graph_destructor_forward.1} parent=5 // pred_region
        %s1682 = ssub.s32 %s29, 2
        // Predicated region
        $region104: #{graph_destructor_forward.1} parent=102 // pred_check
          %p1683 = pneg %p393
        $region105: #{graph_destructor_forward.1} parent=102 // pred_check_branch
          %1685 = sbr.rel (%p1683) target = $region107
        $region106: #{graph_destructor_forward.1} parent=102 // pred_region
          %s1686 = sand.u32 %s378, 1
          %s1687 = scalar_lea.sflag [#allocation10], %s1686
          %s1688 = sand.u32 %s378, 1
          %s1689 = scalar_lea.vmem [#allocation9], %s1688
          %1690 = dma.done %s1687, 16
        $region107: #{graph_destructor_forward.1} parent=102 // pred_fallthru
          _
        // Predicated region
        $region108: #{graph_destructor_forward.1} parent=102 // pred_check
          %p1691 = pneg %p419
        $region109: #{graph_destructor_forward.1} parent=102 // pred_check_branch
          %1693 = sbr.rel (%p1691) target = $region111
        $region110: #{graph_destructor_forward.1} parent=102 // pred_region
          %p1694 = scmp.lt.s32.totalorder %s35, 1
          %s1695 = scalar_select %p1694, %s35, 1
          %s1696 = scalar_lea.vmem %s16, %s1695
        $region111: #{graph_destructor_forward.1} parent=102 // pred_fallthru
          _
        // Predicated region
        $region112: #{graph_destructor_forward.1} parent=102 // pred_check
          %p1697 = pneg %p445
        $region113: #{graph_destructor_forward.1} parent=102 // pred_check_branch
          %1699 = sbr.rel (%p1697) target = $region115
        $region114: #{graph_destructor_forward.1} parent=102 // pred_region
          %p1700 = scmp.lt.s32.totalorder %s35, 1
          %s1701 = scalar_select %p1700, %s35, 1
          %s1702 = scalar_lea.vmem %s17, %s1701
        $region115: #{graph_destructor_forward.1} parent=102 // pred_fallthru
          _
      $region103: #{graph_destructor_forward.1} parent=5 // pred_fallthru
        _
    $region6: #{graph_destructor_forward.1} parent=1 // loop_footer
      %s33 = sadd.s32 1, %s29
    $region7: #{graph_destructor_forward.1} parent=1 // loop_footer_branch
      %28 = sbr.rel target = $region3
    $region8: #{graph_destructor_forward.1} parent=1 // loop_exit
      _
    %1703 = vsyncpa [#allocation10], 1
    %s1704 = scalar_lea.sflag [#allocation10], 1
    %1705 = vsyncpa %s1704, 1

</llo_original>
